<compile_context>
chip_gen: v7x
topology: tpu7x:2x2x1
jax: 0.10.0
libtpu: 0.0.40
codegen_flags: <defaults>
</compile_context>

<pallas_src>
import math
import jax
import jax.numpy as jnp
from jax.experimental import pallas as pl
from jax.experimental.pallas import tpu as pltpu

# --- model hyper-parameters (match FlowCell.__init__ defaults) -------------
Z_DIM = 8
FLOW_DEPTH = 3
HIDDEN = 32            # intermediate_dim of the coupling MLP (small for demo)
W_INIT_SIGMA = 0.001
D = Z_DIM - Z_DIM // 2  # conditioning half size (= 4 for z_dim=8)
OUT_DIM = Z_DIM - D     # transformed half size
assert Z_DIM % 2 == 0 and D == Z_DIM // 2, "packed-weight formulation assumes even z_dim"

LOG_Z = -0.5 * math.log(2.0 * math.pi)

# --- packed (transposed) weight blob layout, lane width = HIDDEN ------------
# per layer (all chunks 8-row aligned):
#   W1T chunk (32 rows): w1^T in lanes [0, Z_DIM) with swap folded (zero cols
#                        on the non-conditioning features)
#   B12 chunk (32 rows): lane 0 = b1 column, lane 1 = b2 column
#   W2T chunk (32 rows): w2^T
#   W3C chunk (16 rows): rows [0, Z_DIM)   = scale weights on transformed rows
#                        rows [Z_DIM, 2Z)  = shift weights on transformed rows
#   B3  chunk ( 8 rows): lane 0 = b3_scale column, lane 1 = b3_shift column
LAYER_ROWS = 120
W1T_OFF, B12_OFF, W2T_OFF, W3C_OFF, B3_OFF = 0, 32, 64, 96, 112


def _round_up(x, m):
    return ((x + m - 1) // m) * m


# --- Pallas kernel ----------------------------------------------------------
def flowcell_kernel(x_ref, w_ref, out_ref):
    x = x_ref[...]                                   # (Z_DIM, bt), f32
    bt = x.shape[1]

    # sublane mask selecting the transformed half (built once, reused per layer)
    row = jax.lax.broadcasted_iota(jnp.int32, (Z_DIM, 1), 0)
    mask_lo = row < D                                # transformed rows when swap=True

    delta_logp = jnp.zeros((1, bt), jnp.float32)

    for i in range(FLOW_DEPTH):
        r = i * LAYER_ROWS
        w1t = w_ref[pl.ds(r + W1T_OFF, HIDDEN), pl.ds(0, Z_DIM)]    # (H, Z) swap folded
        b1 = w_ref[pl.ds(r + B12_OFF, HIDDEN), pl.ds(0, 1)]         # (H, 1)
        b2 = w_ref[pl.ds(r + B12_OFF, HIDDEN), pl.ds(1, 1)]         # (H, 1)
        w2t = w_ref[pl.ds(r + W2T_OFF, HIDDEN), :]                  # (H, H)
        w3c = w_ref[pl.ds(r + W3C_OFF, 2 * Z_DIM), :]               # (2Z, H) [scale; shift]
        b3s = w_ref[pl.ds(r + B3_OFF, Z_DIM), pl.ds(0, 1)]          # (Z, 1)
        b3t = w_ref[pl.ds(r + B3_OFF, Z_DIM), pl.ds(1, 1)]          # (Z, 1)

        # conditioning-half MLP (non-conditioning features contribute 0 via zero cols of w1t)
        h = jnp.maximum(jnp.dot(w1t, x, preferred_element_type=jnp.float32) + b1, 0.0)
        h = jnp.maximum(jnp.dot(w2t, h, preferred_element_type=jnp.float32) + b2, 0.0)
        st = jnp.dot(w3c, h, preferred_element_type=jnp.float32)    # (2Z, bt)
        s_pre = st[:Z_DIM, :] + b3s + 2.0                           # (Z, bt)
        shift = st[Z_DIM:, :] + b3t                                 # (Z, bt)

        mask = mask_lo if (i % 2 == 0) else jnp.logical_not(mask_lo)

        # sigmoid and log(sigmoid) sharing a single exp
        e = jnp.exp(-s_pre)
        scale = 1.0 / (1.0 + e)
        log_scale = -jnp.log1p(e)                                   # log(sigmoid(s+2))

        logdet = jnp.sum(jnp.where(mask, log_scale, 0.0), axis=0, keepdims=True)  # (1, bt)
        x = jnp.where(mask, x * scale + shift, x)
        delta_logp = delta_logp - logdet                            # layer adds -logdetjac

    # standard_normal_logprob(z) summed over features, per sample (8-sublane reduce)
    logpz = jnp.sum(LOG_Z - 0.5 * x * x, axis=0, keepdims=True)     # (1, bt)
    logpx = logpz - delta_logp

    # output slab rows: [ z (Z_DIM rows) | -delta_logp | log_px ]
    out_ref[:Z_DIM, :] = x
    out_ref[Z_DIM:Z_DIM + 1, :] = -delta_logp
    out_ref[Z_DIM + 1:Z_DIM + 2, :] = logpx


# --- weight packing ---------------------------------------------------------
def pack_params(params):
    """Pack the 6*FLOW_DEPTH weights into one transposed f32 blob, swap folded in."""
    chunks = []
    for i, (w1, b1, w2, b2, w3, b3) in enumerate(params):
        swap = (i % 2 == 0)
        c0 = D if swap else 0          # first conditioning feature (original lane order)
        t0 = 0 if swap else D          # first transformed feature

        w1 = jnp.asarray(w1, jnp.float32)
        b1 = jnp.asarray(b1, jnp.float32)
        w2 = jnp.asarray(w2, jnp.float32)
        b2 = jnp.asarray(b2, jnp.float32)
        w3 = jnp.asarray(w3, jnp.float32)
        b3 = jnp.asarray(b3, jnp.float32)

        # W1T chunk: (H, H), lanes [0, Z_DIM) hold w1^T placed on conditioning features
        w1c = jnp.zeros((HIDDEN, HIDDEN), jnp.float32)
        w1c = w1c.at[:, c0:c0 + D].set(w1.T)

        # B12 chunk: lane 0 = b1 column, lane 1 = b2 column
        b12 = jnp.zeros((HIDDEN, HIDDEN), jnp.float32)
        b12 = b12.at[:, 0].set(b1[0]).at[:, 1].set(b2[0])

        # W2T chunk
        w2c = w2.T

        # W3 combined chunk: scale then shift, rows placed on the transformed features
        w3c = jnp.zeros((2 * Z_DIM, HIDDEN), jnp.float32)
        w3c = w3c.at[t0:t0 + OUT_DIM, :].set(w3[:, :OUT_DIM].T)
        w3c = w3c.at[Z_DIM + t0:Z_DIM + t0 + OUT_DIM, :].set(w3[:, OUT_DIM:].T)

        # B3 chunk: lane 0 = b3_scale column, lane 1 = b3_shift column
        b3c = jnp.zeros((Z_DIM, HIDDEN), jnp.float32)
        b3c = b3c.at[t0:t0 + OUT_DIM, 0].set(b3[0, :OUT_DIM])
        b3c = b3c.at[t0:t0 + OUT_DIM, 1].set(b3[0, OUT_DIM:])

        chunks += [w1c, b12, w2c, w3c, b3c]

    blob = jnp.concatenate(chunks, axis=0)           # (FLOW_DEPTH*LAYER_ROWS, HIDDEN)
    assert blob.shape == (FLOW_DEPTH * LAYER_ROWS, HIDDEN)
    return blob


# --- wrapper ----------------------------------------------------------------
def _pick_tile(n, batch_tile):
    """Batch (lane-axis) tile: multiple of 128; keep >=2 parallel grid steps when possible."""
    bt = max(128, _round_up(int(batch_tile), 128))
    n128 = _round_up(max(int(n), 1), 128)
    bt = min(bt, n128)
    if bt == n128 and n128 > 128:
        # v7x has 2 TensorCores sharding the parallel grid axis; avoid a 1-step grid.
        bt = _round_up((n128 + 1) // 2, 128)
    n_pad = _round_up(n128, bt)
    return bt, n_pad


def flowcell_forward(x, params, *, batch_tile=2048):
    """Returns (z, ndelta_logp, log_px) exactly like FlowCell.forward."""
    n = x.shape[0]
    assert x.shape[1] == Z_DIM
    x = x.astype(jnp.float32)

    bt, n_pad = _pick_tile(n, batch_tile)
    assert bt % 128 == 0 and n_pad % bt == 0

    xt = jnp.transpose(x)                            # (Z_DIM, n): feature-on-sublane
    if n_pad != n:
        xt = jnp.pad(xt, ((0, 0), (0, n_pad - n)))

    blob = pack_params(params)                       # (360, 32) resident weight blob

    x_spec = pl.BlockSpec((Z_DIM, bt), lambda i: (0, i))
    w_spec = pl.BlockSpec(blob.shape, lambda i: (0, 0))
    out_spec = pl.BlockSpec((Z_DIM + 2, bt), lambda i: (0, i))

    out = pl.pallas_call(
        flowcell_kernel,
        out_shape=jax.ShapeDtypeStruct((Z_DIM + 2, n_pad), jnp.float32),
        grid_spec=pltpu.PrefetchScalarGridSpec(
            num_scalar_prefetch=0,
            grid=(n_pad // bt,),
            in_specs=[x_spec, w_spec],
            out_specs=out_spec,
        ),
        compiler_params=pltpu.CompilerParams(dimension_semantics=("parallel",)),
    )(xt, blob)

    out = jnp.transpose(out)[:n]                     # (n, Z_DIM+2)
    z = out[:, :Z_DIM]
    ndelta_logp = out[:, Z_DIM:Z_DIM + 1]
    log_px = out[:, Z_DIM + 1:Z_DIM + 2]
    return z, ndelta_logp, log_px


# --- deterministic parameter init (synthetic, no checkpoint) ----------------
def init_params(key):
    params = []
    for i in range(FLOW_DEPTH):
        k1, k2, k3 = jax.random.split(jax.random.fold_in(key, i), 3)
        w1 = jax.random.normal(k1, (D, HIDDEN), jnp.float32) / jnp.sqrt(D)
        b1 = jnp.zeros((1, HIDDEN), jnp.float32)
        w2 = jax.random.normal(k2, (HIDDEN, HIDDEN), jnp.float32) / jnp.sqrt(HIDDEN)
        b2 = jnp.zeros((1, HIDDEN), jnp.float32)
        # last layer initialized with w_init_sigma, as in the module
        w3 = jax.random.normal(k3, (HIDDEN, OUT_DIM * 2), jnp.float32) * W_INIT_SIGMA
        b3 = jnp.zeros((1, OUT_DIM * 2), jnp.float32)
        params.append((w1, b1, w2, b2, w3, b3))
    return params


# --- pure-JAX reference (literal coupling math with concats/slices) ---------
def _coupling(x, w1, b1, w2, b2, w3, b3, swap):
    d = D
    if swap:
        x = jnp.concatenate([x[:, d:], x[:, :d]], axis=1)
    xa = x[:, :d]          # conditioning half
    xb = x[:, d:]          # transformed half
    h = jnp.maximum(jnp.dot(xa, w1, preferred_element_type=jnp.float32) + b1, 0.0)
    h = jnp.maximum(jnp.dot(h, w2, preferred_element_type=jnp.float32) + b2, 0.0)
    s_t = jnp.dot(h, w3, preferred_element_type=jnp.float32) + b3
    scale = jax.nn.sigmoid(s_t[:, :OUT_DIM] + 2.0)
    shift = s_t[:, OUT_DIM:]
    logdet = jnp.sum(jnp.log(scale), axis=1, keepdims=True)
    y1 = xb * scale + shift
    y = jnp.concatenate([y1, xa], axis=1) if swap else jnp.concatenate([xa, y1], axis=1)
    return y, logdet


def flowcell_reference(x, params):
    x = x.astype(jnp.float32)
    delta_logp = jnp.zeros((x.shape[0], 1), jnp.float32)
    for i, (w1, b1, w2, b2, w3, b3) in enumerate(params):
        x, logdet = _coupling(x, w1, b1, w2, b2, w3, b3, i % 2 == 0)
        delta_logp = delta_logp - logdet
    logpz = jnp.sum(LOG_Z - 0.5 * x * x, axis=1, keepdims=True)
    return x, -delta_logp, logpz - delta_logp
    # TODO(synk): px_compute's np.exp(logpx) on host (numpy detach path) is
    # glue outside the kernel and intentionally not reproduced here.


if __name__ == "__main__":
    key = jax.random.PRNGKey(0)
    kx, kp = jax.random.split(key)

    batch = 500   # pads to 512 columns -> 2 parallel grid steps of 256 lanes
    x = jax.random.normal(kx, (batch, Z_DIM), dtype=jnp.float32)
    params = init_params(kp)

    z, ndelta_logp, log_px = flowcell_forward(x, params, batch_tile=2048)
    jax.block_until_ready((z, ndelta_logp, log_px))

    z_ref, ndlp_ref, logpx_ref = flowcell_reference(x, params)
    assert jnp.allclose(z, z_ref, atol=1e-5, rtol=1e-5)
    assert jnp.allclose(ndelta_logp, ndlp_ref, atol=1e-5, rtol=1e-5)
    assert jnp.allclose(log_px, logpx_ref, atol=1e-5, rtol=1e-5)

    print("KERNEL_OK")
</pallas_src>

<mosaic_0001>
module attributes {stable_mosaic.version = 11 : i64} {
  func.func @flowcell_kernel(%arg0: i32, %arg1: memref<8x256xf32, #tpu.memory_space<vmem>>, %arg2: memref<360x32xf32, #tpu.memory_space<vmem>>, %arg3: memref<10x256xf32, #tpu.memory_space<vmem>>) attributes {dimension_semantics = [#tpu.dimension_semantics<parallel>], iteration_bounds = array<i64: 2>, scalar_prefetch = 0 : i64, scratch_operands = 0 : i64, tpu.core_type = #tpu.core_type<tc>, window_params = [{transform_indices = @transform_0, window_bounds = array<i64: 8, 256>}, {pipeline_mode = #tpu.pipeline_mode<synchronous>, transform_indices = @transform_1, window_bounds = array<i64: 360, 32>}, {transform_indices = @transform_2, window_bounds = array<i64: 10, 256>}]} {
    %c0 = arith.constant 0 : index
    %c0_0 = arith.constant 0 : index
    %0 = vector.load %arg1[%c0, %c0_0] : memref<8x256xf32, #tpu.memory_space<vmem>>, vector<8x256xf32>
    %1 = tpu.iota {dimensions = array<i32: 0>} : vector<8x1xi32>
    %c4_i32 = arith.constant 4 : i32
    %2 = vector.broadcast %c4_i32 : i32 to vector<8x1xi32>
    %3 = arith.cmpi slt, %1, %2 : vector<8x1xi32>
    %cst = arith.constant 0.000000e+00 : f32
    %4 = vector.broadcast %cst : f32 to vector<1x256xf32>
    %c0_1 = arith.constant 0 : index
    %c0_2 = arith.constant 0 : index
    %5 = vector.load %arg2[%c0_1, %c0_2] : memref<360x32xf32, #tpu.memory_space<vmem>>, vector<32x8xf32>
    %c32 = arith.constant 32 : index
    %c0_3 = arith.constant 0 : index
    %6 = vector.load %arg2[%c32, %c0_3] : memref<360x32xf32, #tpu.memory_space<vmem>>, vector<32x1xf32>
    %c32_4 = arith.constant 32 : index
    %c1 = arith.constant 1 : index
    %7 = vector.load %arg2[%c32_4, %c1] : memref<360x32xf32, #tpu.memory_space<vmem>>, vector<32x1xf32>
    %c64 = arith.constant 64 : index
    %c0_5 = arith.constant 0 : index
    %8 = vector.load %arg2[%c64, %c0_5] : memref<360x32xf32, #tpu.memory_space<vmem>>, vector<32x32xf32>
    %c96 = arith.constant 96 : index
    %c0_6 = arith.constant 0 : index
    %9 = vector.load %arg2[%c96, %c0_6] : memref<360x32xf32, #tpu.memory_space<vmem>>, vector<16x32xf32>
    %c112 = arith.constant 112 : index
    %c0_7 = arith.constant 0 : index
    %10 = vector.load %arg2[%c112, %c0_7] : memref<360x32xf32, #tpu.memory_space<vmem>>, vector<8x1xf32>
    %c112_8 = arith.constant 112 : index
    %c1_9 = arith.constant 1 : index
    %11 = vector.load %arg2[%c112_8, %c1_9] : memref<360x32xf32, #tpu.memory_space<vmem>>, vector<8x1xf32>
    %cst_10 = arith.constant dense<0.000000e+00> : vector<32x256xf32>
    %12 = tpu.matmul %5, %0, %cst_10 {dimension_numbers = #tpu.dot_dimension_numbers<[1], [0], [0], [1], [0, 0, 1, 1], [], []>} : vector<32x8xf32>, vector<8x256xf32>, vector<32x256xf32> -> vector<32x256xf32>
    %13 = vector.broadcast %6 : vector<32x1xf32> to vector<32x256xf32>
    %14 = arith.addf %12, %13 : vector<32x256xf32>
    %cst_11 = arith.constant 0.000000e+00 : f32
    %15 = vector.broadcast %cst_11 : f32 to vector<32x256xf32>
    %16 = arith.maximumf %14, %15 : vector<32x256xf32>
    %cst_12 = arith.constant dense<0.000000e+00> : vector<32x256xf32>
    %17 = tpu.matmul %8, %16, %cst_12 {dimension_numbers = #tpu.dot_dimension_numbers<[1], [0], [0], [1], [0, 0, 1, 1], [], []>} : vector<32x32xf32>, vector<32x256xf32>, vector<32x256xf32> -> vector<32x256xf32>
    %18 = vector.broadcast %7 : vector<32x1xf32> to vector<32x256xf32>
    %19 = arith.addf %17, %18 : vector<32x256xf32>
    %cst_13 = arith.constant 0.000000e+00 : f32
    %20 = vector.broadcast %cst_13 : f32 to vector<32x256xf32>
    %21 = arith.maximumf %19, %20 : vector<32x256xf32>
    %cst_14 = arith.constant dense<0.000000e+00> : vector<16x256xf32>
    %22 = tpu.matmul %9, %21, %cst_14 {dimension_numbers = #tpu.dot_dimension_numbers<[1], [0], [0], [1], [0, 0, 1, 1], [], []>} : vector<16x32xf32>, vector<32x256xf32>, vector<16x256xf32> -> vector<16x256xf32>
    %23 = vector.extract_strided_slice %22 {offsets = [0, 0], sizes = [8, 256], strides = [1, 1]} : vector<16x256xf32> to vector<8x256xf32>
    %24 = vector.broadcast %10 : vector<8x1xf32> to vector<8x256xf32>
    %25 = arith.addf %23, %24 : vector<8x256xf32>
    %cst_15 = arith.constant 2.000000e+00 : f32
    %26 = vector.broadcast %cst_15 : f32 to vector<8x256xf32>
    %27 = arith.addf %25, %26 : vector<8x256xf32>
    %28 = vector.extract_strided_slice %22 {offsets = [8, 0], sizes = [8, 256], strides = [1, 1]} : vector<16x256xf32> to vector<8x256xf32>
    %29 = vector.broadcast %11 : vector<8x1xf32> to vector<8x256xf32>
    %30 = arith.addf %28, %29 : vector<8x256xf32>
    %cst_16 = arith.constant 0.000000e+00 : f32
    %31 = vector.broadcast %cst_16 : f32 to vector<8x256xf32>
    %32 = arith.subf %31, %27 : vector<8x256xf32>
    %33 = math.exp %32 : vector<8x256xf32>
    %cst_17 = arith.constant 1.000000e+00 : f32
    %34 = vector.broadcast %cst_17 : f32 to vector<8x256xf32>
    %35 = arith.addf %34, %33 : vector<8x256xf32>
    %cst_18 = arith.constant 1.000000e+00 : f32
    %36 = vector.broadcast %cst_18 : f32 to vector<8x256xf32>
    %37 = arith.divf %36, %35 : vector<8x256xf32>
    %38 = math.log1p %33 : vector<8x256xf32>
    %cst_19 = arith.constant 0.000000e+00 : f32
    %39 = vector.broadcast %cst_19 : f32 to vector<8x256xf32>
    %40 = arith.subf %39, %38 : vector<8x256xf32>
    %cst_20 = arith.constant 0.000000e+00 : f32
    %41 = vector.shape_cast %3 : vector<8x1xi1> to vector<8x1xi1>
    %42 = vector.broadcast %41 : vector<8x1xi1> to vector<8x256xi1>
    %43 = vector.broadcast %cst_20 : f32 to vector<8x256xf32>
    %44 = arith.select %42, %40, %43 : vector<8x256xi1>, vector<8x256xf32>
    %cst_21 = arith.constant dense<0.000000e+00> : vector<256xf32>
    %45 = vector.multi_reduction <add>, %44, %cst_21 [0] : vector<8x256xf32> to vector<256xf32>
    %46 = vector.shape_cast %45 : vector<256xf32> to vector<1x256xf32>
    %47 = arith.mulf %0, %37 : vector<8x256xf32>
    %48 = arith.addf %47, %30 : vector<8x256xf32>
    %49 = vector.shape_cast %3 : vector<8x1xi1> to vector<8x1xi1>
    %50 = vector.broadcast %49 : vector<8x1xi1> to vector<8x256xi1>
    %51 = arith.select %50, %48, %0 : vector<8x256xi1>, vector<8x256xf32>
    %52 = arith.subf %4, %46 : vector<1x256xf32>
    %c120 = arith.constant 120 : index
    %c0_22 = arith.constant 0 : index
    %53 = vector.load %arg2[%c120, %c0_22] : memref<360x32xf32, #tpu.memory_space<vmem>>, vector<32x8xf32>
    %c152 = arith.constant 152 : index
    %c0_23 = arith.constant 0 : index
    %54 = vector.load %arg2[%c152, %c0_23] : memref<360x32xf32, #tpu.memory_space<vmem>>, vector<32x1xf32>
    %c152_24 = arith.constant 152 : index
    %c1_25 = arith.constant 1 : index
    %55 = vector.load %arg2[%c152_24, %c1_25] : memref<360x32xf32, #tpu.memory_space<vmem>>, vector<32x1xf32>
    %c184 = arith.constant 184 : index
    %c0_26 = arith.constant 0 : index
    %56 = vector.load %arg2[%c184, %c0_26] : memref<360x32xf32, #tpu.memory_space<vmem>>, vector<32x32xf32>
    %c216 = arith.constant 216 : index
    %c0_27 = arith.constant 0 : index
    %57 = vector.load %arg2[%c216, %c0_27] : memref<360x32xf32, #tpu.memory_space<vmem>>, vector<16x32xf32>
    %c232 = arith.constant 232 : index
    %c0_28 = arith.constant 0 : index
    %58 = vector.load %arg2[%c232, %c0_28] : memref<360x32xf32, #tpu.memory_space<vmem>>, vector<8x1xf32>
    %c232_29 = arith.constant 232 : index
    %c1_30 = arith.constant 1 : index
    %59 = vector.load %arg2[%c232_29, %c1_30] : memref<360x32xf32, #tpu.memory_space<vmem>>, vector<8x1xf32>
    %cst_31 = arith.constant dense<0.000000e+00> : vector<32x256xf32>
    %60 = tpu.matmul %53, %51, %cst_31 {dimension_numbers = #tpu.dot_dimension_numbers<[1], [0], [0], [1], [0, 0, 1, 1], [], []>} : vector<32x8xf32>, vector<8x256xf32>, vector<32x256xf32> -> vector<32x256xf32>
    %61 = vector.broadcast %54 : vector<32x1xf32> to vector<32x256xf32>
    %62 = arith.addf %60, %61 : vector<32x256xf32>
    %cst_32 = arith.constant 0.000000e+00 : f32
    %63 = vector.broadcast %cst_32 : f32 to vector<32x256xf32>
    %64 = arith.maximumf %62, %63 : vector<32x256xf32>
    %cst_33 = arith.constant dense<0.000000e+00> : vector<32x256xf32>
    %65 = tpu.matmul %56, %64, %cst_33 {dimension_numbers = #tpu.dot_dimension_numbers<[1], [0], [0], [1], [0, 0, 1, 1], [], []>} : vector<32x32xf32>, vector<32x256xf32>, vector<32x256xf32> -> vector<32x256xf32>
    %66 = vector.broadcast %55 : vector<32x1xf32> to vector<32x256xf32>
    %67 = arith.addf %65, %66 : vector<32x256xf32>
    %cst_34 = arith.constant 0.000000e+00 : f32
    %68 = vector.broadcast %cst_34 : f32 to vector<32x256xf32>
    %69 = arith.maximumf %67, %68 : vector<32x256xf32>
    %cst_35 = arith.constant dense<0.000000e+00> : vector<16x256xf32>
    %70 = tpu.matmul %57, %69, %cst_35 {dimension_numbers = #tpu.dot_dimension_numbers<[1], [0], [0], [1], [0, 0, 1, 1], [], []>} : vector<16x32xf32>, vector<32x256xf32>, vector<16x256xf32> -> vector<16x256xf32>
    %71 = vector.extract_strided_slice %70 {offsets = [0, 0], sizes = [8, 256], strides = [1, 1]} : vector<16x256xf32> to vector<8x256xf32>
    %72 = vector.broadcast %58 : vector<8x1xf32> to vector<8x256xf32>
    %73 = arith.addf %71, %72 : vector<8x256xf32>
    %cst_36 = arith.constant 2.000000e+00 : f32
    %74 = vector.broadcast %cst_36 : f32 to vector<8x256xf32>
    %75 = arith.addf %73, %74 : vector<8x256xf32>
    %76 = vector.extract_strided_slice %70 {offsets = [8, 0], sizes = [8, 256], strides = [1, 1]} : vector<16x256xf32> to vector<8x256xf32>
    %77 = vector.broadcast %59 : vector<8x1xf32> to vector<8x256xf32>
    %78 = arith.addf %76, %77 : vector<8x256xf32>
    %cst_37 = arith.constant dense<true> : vector<8x1xi1>
    %79 = arith.xori %3, %cst_37 : vector<8x1xi1>
    %cst_38 = arith.constant 0.000000e+00 : f32
    %80 = vector.broadcast %cst_38 : f32 to vector<8x256xf32>
    %81 = arith.subf %80, %75 : vector<8x256xf32>
    %82 = math.exp %81 : vector<8x256xf32>
    %cst_39 = arith.constant 1.000000e+00 : f32
    %83 = vector.broadcast %cst_39 : f32 to vector<8x256xf32>
    %84 = arith.addf %83, %82 : vector<8x256xf32>
    %cst_40 = arith.constant 1.000000e+00 : f32
    %85 = vector.broadcast %cst_40 : f32 to vector<8x256xf32>
    %86 = arith.divf %85, %84 : vector<8x256xf32>
    %87 = math.log1p %82 : vector<8x256xf32>
    %cst_41 = arith.constant 0.000000e+00 : f32
    %88 = vector.broadcast %cst_41 : f32 to vector<8x256xf32>
    %89 = arith.subf %88, %87 : vector<8x256xf32>
    %cst_42 = arith.constant 0.000000e+00 : f32
    %90 = vector.shape_cast %79 : vector<8x1xi1> to vector<8x1xi1>
    %91 = vector.broadcast %90 : vector<8x1xi1> to vector<8x256xi1>
    %92 = vector.broadcast %cst_42 : f32 to vector<8x256xf32>
    %93 = arith.select %91, %89, %92 : vector<8x256xi1>, vector<8x256xf32>
    %cst_43 = arith.constant dense<0.000000e+00> : vector<256xf32>
    %94 = vector.multi_reduction <add>, %93, %cst_43 [0] : vector<8x256xf32> to vector<256xf32>
    %95 = vector.shape_cast %94 : vector<256xf32> to vector<1x256xf32>
    %96 = arith.mulf %51, %86 : vector<8x256xf32>
    %97 = arith.addf %96, %78 : vector<8x256xf32>
    %98 = vector.shape_cast %79 : vector<8x1xi1> to vector<8x1xi1>
    %99 = vector.broadcast %98 : vector<8x1xi1> to vector<8x256xi1>
    %100 = arith.select %99, %97, %51 : vector<8x256xi1>, vector<8x256xf32>
    %101 = arith.subf %52, %95 : vector<1x256xf32>
    %c240 = arith.constant 240 : index
    %c0_44 = arith.constant 0 : index
    %102 = vector.load %arg2[%c240, %c0_44] : memref<360x32xf32, #tpu.memory_space<vmem>>, vector<32x8xf32>
    %c272 = arith.constant 272 : index
    %c0_45 = arith.constant 0 : index
    %103 = vector.load %arg2[%c272, %c0_45] : memref<360x32xf32, #tpu.memory_space<vmem>>, vector<32x1xf32>
    %c272_46 = arith.constant 272 : index
    %c1_47 = arith.constant 1 : index
    %104 = vector.load %arg2[%c272_46, %c1_47] : memref<360x32xf32, #tpu.memory_space<vmem>>, vector<32x1xf32>
    %c304 = arith.constant 304 : index
    %c0_48 = arith.constant 0 : index
    %105 = vector.load %arg2[%c304, %c0_48] : memref<360x32xf32, #tpu.memory_space<vmem>>, vector<32x32xf32>
    %c336 = arith.constant 336 : index
    %c0_49 = arith.constant 0 : index
    %106 = vector.load %arg2[%c336, %c0_49] : memref<360x32xf32, #tpu.memory_space<vmem>>, vector<16x32xf32>
    %c352 = arith.constant 352 : index
    %c0_50 = arith.constant 0 : index
    %107 = vector.load %arg2[%c352, %c0_50] : memref<360x32xf32, #tpu.memory_space<vmem>>, vector<8x1xf32>
    %c352_51 = arith.constant 352 : index
    %c1_52 = arith.constant 1 : index
    %108 = vector.load %arg2[%c352_51, %c1_52] : memref<360x32xf32, #tpu.memory_space<vmem>>, vector<8x1xf32>
    %cst_53 = arith.constant dense<0.000000e+00> : vector<32x256xf32>
    %109 = tpu.matmul %102, %100, %cst_53 {dimension_numbers = #tpu.dot_dimension_numbers<[1], [0], [0], [1], [0, 0, 1, 1], [], []>} : vector<32x8xf32>, vector<8x256xf32>, vector<32x256xf32> -> vector<32x256xf32>
    %110 = vector.broadcast %103 : vector<32x1xf32> to vector<32x256xf32>
    %111 = arith.addf %109, %110 : vector<32x256xf32>
    %cst_54 = arith.constant 0.000000e+00 : f32
    %112 = vector.broadcast %cst_54 : f32 to vector<32x256xf32>
    %113 = arith.maximumf %111, %112 : vector<32x256xf32>
    %cst_55 = arith.constant dense<0.000000e+00> : vector<32x256xf32>
    %114 = tpu.matmul %105, %113, %cst_55 {dimension_numbers = #tpu.dot_dimension_numbers<[1], [0], [0], [1], [0, 0, 1, 1], [], []>} : vector<32x32xf32>, vector<32x256xf32>, vector<32x256xf32> -> vector<32x256xf32>
    %115 = vector.broadcast %104 : vector<32x1xf32> to vector<32x256xf32>
    %116 = arith.addf %114, %115 : vector<32x256xf32>
    %cst_56 = arith.constant 0.000000e+00 : f32
    %117 = vector.broadcast %cst_56 : f32 to vector<32x256xf32>
    %118 = arith.maximumf %116, %117 : vector<32x256xf32>
    %cst_57 = arith.constant dense<0.000000e+00> : vector<16x256xf32>
    %119 = tpu.matmul %106, %118, %cst_57 {dimension_numbers = #tpu.dot_dimension_numbers<[1], [0], [0], [1], [0, 0, 1, 1], [], []>} : vector<16x32xf32>, vector<32x256xf32>, vector<16x256xf32> -> vector<16x256xf32>
    %120 = vector.extract_strided_slice %119 {offsets = [0, 0], sizes = [8, 256], strides = [1, 1]} : vector<16x256xf32> to vector<8x256xf32>
    %121 = vector.broadcast %107 : vector<8x1xf32> to vector<8x256xf32>
    %122 = arith.addf %120, %121 : vector<8x256xf32>
    %cst_58 = arith.constant 2.000000e+00 : f32
    %123 = vector.broadcast %cst_58 : f32 to vector<8x256xf32>
    %124 = arith.addf %122, %123 : vector<8x256xf32>
    %125 = vector.extract_strided_slice %119 {offsets = [8, 0], sizes = [8, 256], strides = [1, 1]} : vector<16x256xf32> to vector<8x256xf32>
    %126 = vector.broadcast %108 : vector<8x1xf32> to vector<8x256xf32>
    %127 = arith.addf %125, %126 : vector<8x256xf32>
    %cst_59 = arith.constant 0.000000e+00 : f32
    %128 = vector.broadcast %cst_59 : f32 to vector<8x256xf32>
    %129 = arith.subf %128, %124 : vector<8x256xf32>
    %130 = math.exp %129 : vector<8x256xf32>
    %cst_60 = arith.constant 1.000000e+00 : f32
    %131 = vector.broadcast %cst_60 : f32 to vector<8x256xf32>
    %132 = arith.addf %131, %130 : vector<8x256xf32>
    %cst_61 = arith.constant 1.000000e+00 : f32
    %133 = vector.broadcast %cst_61 : f32 to vector<8x256xf32>
    %134 = arith.divf %133, %132 : vector<8x256xf32>
    %135 = math.log1p %130 : vector<8x256xf32>
    %cst_62 = arith.constant 0.000000e+00 : f32
    %136 = vector.broadcast %cst_62 : f32 to vector<8x256xf32>
    %137 = arith.subf %136, %135 : vector<8x256xf32>
    %cst_63 = arith.constant 0.000000e+00 : f32
    %138 = vector.shape_cast %3 : vector<8x1xi1> to vector<8x1xi1>
    %139 = vector.broadcast %138 : vector<8x1xi1> to vector<8x256xi1>
    %140 = vector.broadcast %cst_63 : f32 to vector<8x256xf32>
    %141 = arith.select %139, %137, %140 : vector<8x256xi1>, vector<8x256xf32>
    %cst_64 = arith.constant dense<0.000000e+00> : vector<256xf32>
    %142 = vector.multi_reduction <add>, %141, %cst_64 [0] : vector<8x256xf32> to vector<256xf32>
    %143 = vector.shape_cast %142 : vector<256xf32> to vector<1x256xf32>
    %144 = arith.mulf %100, %134 : vector<8x256xf32>
    %145 = arith.addf %144, %127 : vector<8x256xf32>
    %146 = vector.shape_cast %3 : vector<8x1xi1> to vector<8x1xi1>
    %147 = vector.broadcast %146 : vector<8x1xi1> to vector<8x256xi1>
    %148 = arith.select %147, %145, %100 : vector<8x256xi1>, vector<8x256xf32>
    %149 = arith.subf %101, %143 : vector<1x256xf32>
    %cst_65 = arith.constant 5.000000e-01 : f32
    %150 = vector.broadcast %cst_65 : f32 to vector<8x256xf32>
    %151 = arith.mulf %150, %148 : vector<8x256xf32>
    %152 = arith.mulf %151, %148 : vector<8x256xf32>
    %cst_66 = arith.constant -0.918938517 : f32
    %153 = vector.broadcast %cst_66 : f32 to vector<8x256xf32>
    %154 = arith.subf %153, %152 : vector<8x256xf32>
    %cst_67 = arith.constant dense<0.000000e+00> : vector<256xf32>
    %155 = vector.multi_reduction <add>, %154, %cst_67 [0] : vector<8x256xf32> to vector<256xf32>
    %156 = vector.shape_cast %155 : vector<256xf32> to vector<1x256xf32>
    %157 = arith.subf %156, %149 : vector<1x256xf32>
    %c0_68 = arith.constant 0 : index
    %c0_69 = arith.constant 0 : index
    %158 = vector.load %arg3[%c0_68, %c0_69] : memref<10x256xf32, #tpu.memory_space<vmem>>, vector<8x256xf32>
    tpu.vector_store %arg3[%c0_68, %c0_69], %148 {strides = array<i32>} : memref<10x256xf32, #tpu.memory_space<vmem>>, vector<8x256xf32>,
    %cst_70 = arith.constant 0.000000e+00 : f32
    %159 = vector.broadcast %cst_70 : f32 to vector<1x256xf32>
    %160 = arith.subf %159, %149 : vector<1x256xf32>
    %c8 = arith.constant 8 : index
    %c0_71 = arith.constant 0 : index
    %161 = vector.load %arg3[%c8, %c0_71] : memref<10x256xf32, #tpu.memory_space<vmem>>, vector<1x256xf32>
    tpu.vector_store %arg3[%c8, %c0_71], %160 {strides = array<i32>} : memref<10x256xf32, #tpu.memory_space<vmem>>, vector<1x256xf32>,
    %c9 = arith.constant 9 : index
    %c0_72 = arith.constant 0 : index
    %162 = vector.load %arg3[%c9, %c0_72] : memref<10x256xf32, #tpu.memory_space<vmem>>, vector<1x256xf32>
    tpu.vector_store %arg3[%c9, %c0_72], %157 {strides = array<i32>} : memref<10x256xf32, #tpu.memory_space<vmem>>, vector<1x256xf32>,
    return
  }
  func.func @transform_0(%arg0: i32) -> (i32, i32) {
    %c0_i32 = arith.constant 0 : i32
    %c0_i32_0 = arith.constant 0 : i32
    return %c0_i32, %arg0 : i32, i32
  }
  func.func @transform_1(%arg0: i32) -> (i32, i32) {
    %c0_i32 = arith.constant 0 : i32
    %c0_i32_0 = arith.constant 0 : i32
    %c0_i32_1 = arith.constant 0 : i32
    return %c0_i32, %c0_i32_0 : i32, i32
  }
  func.func @transform_2(%arg0: i32) -> (i32, i32) {
    %c0_i32 = arith.constant 0 : i32
    %c0_i32_0 = arith.constant 0 : i32
    return %c0_i32, %arg0 : i32, i32
  }
}

</mosaic_0001>

<llo_original>
// kernel: tpu_custom_call.1
$region0: #{tpu_custom_call.1}
  #allocation0 [shape = 'u32[]', space=smem, size = 0x4, offset = 0x4, fixed_abs, tag = 'smem constant byte address 0x4 - core index']
  #allocation1 [shape = 'u32[144,128]{1,0:T(1,128)}', space=vmem, size = 0x12000, scoped, tag = 'internal scratch']
  %s0 = inlined_call_operand.vmem [shape: f32[8,512], index: 0, kind: input, shape index: {}]
  %s1 = inlined_call_operand.vmem [shape: f32[360,32], index: 1, kind: input, shape index: {}]
  %s2 = inlined_call_operand.hbm [shape: f32[10,512], index: 2, kind: output, shape index: {}]
  %s3 = sld [smem:[#allocation0]]
  $region41: #{tpu_custom_call.1} parent=0
    _
  %s5 = ssub.s32 1, %s3
  %s6 = scalar_select 0, %s5, %s3
  $region1: #{tpu_custom_call.1} parent=0
    #allocation2 [shape = 'u8[32768]{0}', space=vmem, size = 0x8000, scoped, tag = 'output window, operand 0']
    #allocation3 [shape = 's32[2]{0}', space=sflag, size = 0x8, scoped, tag = 'scoped memory for tpu_custom_call.1']
    %7 = vsyncpa [#allocation3], 0
    %s8 = scalar_lea.sflag [#allocation3], 1
    %9 = vsyncpa %s8, 0
    loop: start=0, step=1, limit=4
    $region2: #{tpu_custom_call.1} parent=1 // loop_pre_header
      _
    $region3: #{tpu_custom_call.1} parent=1 // loop_header
      %s11 = sphi 0, %s15
      %p12 = scmp.ge.s32.totalorder %s11, 4
      %s21 = sphi 0, %s23
      %s24 = sphi 0, %s21
      %s25 = sphi 0, %s24
      %s41 = sphi 0, %s25
      %s45 = sphi 0, %s45
      %s47 = sphi 0, %s45
      %s48 = sphi 0, %s47
      %s62 = sphi 0, %s48
      %s68 = sphi 0, %s70
      %s71 = sphi 0, %s68
      %s72 = sphi 0, %s71
      %s88 = sphi 0, %s72
    $region4: #{tpu_custom_call.1} parent=1 // loop_header_branch
      %14 = sbr.rel (%p12) target = $region8
    $region5: #{tpu_custom_call.1} parent=1 // loop_body
      %s16 = ssub.s32 %s11, 1
      %s17 = ssub.s32 %s11, 2
      %s18 = sadd.s32 %s11, 1
      %s19 = ssub.s32 %s11, %s18
      %p20 = scmp.eq.s32.totalorder %s19, 0
      %s22 = sadd.s32 %s21, 1
      %s23 = scalar_select %p20, %s21, %s22
      %p26 = pneg %p20
      %p27 = scmp.eq.s32.totalorder %s11, 1
      %p28 = por %p26, %p27
      %p29 = scmp.ne.s32.totalorder %s21, %s24
      %p30 = scmp.eq.s32.totalorder %s11, 0
      %p31 = por %p29, %p30
      %p32 = scmp.ne.s32.totalorder %s21, %s24
      %p33 = scmp.eq.s32.totalorder %s16, 1
      %p34 = por %p32, %p33
      %p35 = scmp.ne.s32.totalorder %s24, %s25
      %p36 = scmp.eq.s32.totalorder %s16, 0
      %p37 = por %p35, %p36
      %p38 = scmp.ne.s32.totalorder %s24, %s25
      %p39 = scmp.eq.s32.totalorder %s17, 1
      %p40 = por %p38, %p39
      %p42 = scmp.ne.s32.totalorder %s25, %s41
      %p43 = scmp.eq.s32.totalorder %s17, 0
      %p44 = por %p42, %p43
      %s46 = sadd.s32 %s45, 1
      %p49 = scmp.eq.s32.totalorder %s11, 1
      %p50 = scmp.ne.s32.totalorder %s45, %s47
      %p51 = scmp.eq.s32.totalorder %s11, 0
      %p52 = por %p50, %p51
      %p53 = scmp.ne.s32.totalorder %s45, %s47
      %p54 = scmp.eq.s32.totalorder %s16, 1
      %p55 = por %p53, %p54
      %p56 = scmp.ne.s32.totalorder %s47, %s48
      %p57 = scmp.eq.s32.totalorder %s16, 0
      %p58 = por %p56, %p57
      %p59 = scmp.ne.s32.totalorder %s47, %s48
      %p60 = scmp.eq.s32.totalorder %s17, 1
      %p61 = por %p59, %p60
      %p63 = scmp.ne.s32.totalorder %s48, %s62
      %p64 = scmp.eq.s32.totalorder %s17, 0
      %p65 = por %p63, %p64
      %s66 = ssub.s32 %s11, %s18
      %p67 = scmp.eq.s32.totalorder %s66, 0
      %s69 = sadd.s32 %s68, 1
      %s70 = scalar_select %p67, %s68, %s69
      %p73 = pneg %p67
      %p74 = scmp.eq.s32.totalorder %s11, 1
      %p75 = por %p73, %p74
      %p76 = scmp.ne.s32.totalorder %s68, %s71
      %p77 = scmp.eq.s32.totalorder %s11, 0
      %p78 = por %p76, %p77
      %p79 = scmp.ne.s32.totalorder %s68, %s71
      %p80 = scmp.eq.s32.totalorder %s16, 1
      %p81 = por %p79, %p80
      %p82 = scmp.ne.s32.totalorder %s71, %s72
      %p83 = scmp.eq.s32.totalorder %s16, 0
      %p84 = por %p82, %p83
      %p85 = scmp.ne.s32.totalorder %s71, %s72
      %p86 = scmp.eq.s32.totalorder %s17, 1
      %p87 = por %p85, %p86
      %p89 = scmp.ne.s32.totalorder %s72, %s88
      %p90 = scmp.eq.s32.totalorder %s17, 0
      %p91 = por %p89, %p90
      %p92 = scmp.le.s32.totalorder 1, %s11
      %p93 = scmp.lt.s32.totalorder %s11, 3
      %p94 = pnand %p92, %p93
      %p95 = pneg %p94
      // Predicated region
      $region9: #{tpu_custom_call.1} parent=5 // pred_check
        _
      $region10: #{tpu_custom_call.1} parent=5 // pred_check_branch
        %97 = sbr.rel (%p94) target = $region12
      $region11: #{tpu_custom_call.1} parent=5 // pred_region
        %s98 = ssub.s32 %s11, 1
        // Predicated region
        $region13: #{tpu_custom_call.1} parent=11 // pred_check
          %p99 = pneg %p58
        $region14: #{tpu_custom_call.1} parent=11 // pred_check_branch
          %101 = sbr.rel (%p99) target = $region16
        $region15: #{tpu_custom_call.1} parent=11 // pred_region
          _
        $region16: #{tpu_custom_call.1} parent=11 // pred_fallthru
          _
      $region12: #{tpu_custom_call.1} parent=5 // pred_fallthru
        _
      %p102 = scmp.lt.s32.totalorder %s11, 2
      // Predicated region
      $region17: #{tpu_custom_call.1} parent=5 // pred_check
        %p103 = pneg %p102
      $region18: #{tpu_custom_call.1} parent=5 // pred_check_branch
        %105 = sbr.rel (%p103) target = $region20
      $region19: #{tpu_custom_call.1} parent=5 // pred_region
        // Predicated region
        $region21: #{tpu_custom_call.1} parent=19 // pred_check
          %p106 = pneg %p31
        $region22: #{tpu_custom_call.1} parent=19 // pred_check_branch
          %108 = sbr.rel (%p106) target = $region24
        $region23: #{tpu_custom_call.1} parent=19 // pred_region
          %s109 = smul.u32 2, %s11
          %p110 = scmp.lt.s32.totalorder %s109, 3
          %s111 = scalar_select %p110, %s109, 3
          %s112 = smul.addr %s111, 8
          %s113 = scalar_lea.vmem %s0, %s112
          %s114 = smul.u32 2, %s11
        $region24: #{tpu_custom_call.1} parent=19 // pred_fallthru
          _
      $region20: #{tpu_custom_call.1} parent=5 // pred_fallthru
        _
      %p115 = scmp.le.s32.totalorder 1, %s11
      %p116 = scmp.lt.s32.totalorder %s11, 3
      %p117 = pnand %p115, %p116
      %p118 = pneg %p117
      // Predicated region
      $region25: #{tpu_custom_call.1} parent=5 // pred_check
        _
      $region26: #{tpu_custom_call.1} parent=5 // pred_check_branch
        %120 = sbr.rel (%p117) target = $region28
      $region27: #{tpu_custom_call.1} parent=5 // pred_region
        %s121 = ssub.s32 %s11, 1
        %s122 = smul.u32 2, %s16
        %p123 = scmp.lt.s32.totalorder %s122, 3
        %s124 = scalar_select %p123, %s122, 3
        %s125 = smul.addr %s124, 8
        %s126 = scalar_lea.vmem %s0, %s125
        %p127 = pneg %p37
        %p128 = pneg %p34
        %p129 = pneg %p58
        %p130 = pneg %p55
        %p131 = pneg %p84
        %p132 = pneg %p81
        %s133 = sand.u32 %s71, 1
        %s134 = scalar_lea.sflag [#allocation3], %s133
        %s135 = sand.u32 %s71, 1
        %s136 = smul.addr %s135, 32
        %s137 = scalar_lea.vmem [#allocation2], %s136
        %s138 = smul.u32 2, %s16
        %p139 = scmp.lt.s32.totalorder %s138, 3
        %s140 = scalar_select %p139, %s138, 3
        %s141 = smul.addr %s140, 8
        %s142 = scalar_lea.vmem %s0, %s141
        %s143 = smul.u32 2, %s16
        %s144 = smul.u32 2, %s16
        %v145 = vld [vmem:[%s142] sm:$0xff]
        %v146 = vld [vmem:[%s142 + $0x8] sm:$0xff]
        %v147 = vlaneseq
        %v148 = vshrl.u32 %v147, 7
        %vm149 = vcmp.lt.s32.totalorder %v148, 4
        %v150 = vld [vmem:[%s1] sm:$0xff]
        %v151 = vld [vmem:[%s1 + $0x8] sm:$0xff]
        %v152 = vld [vmem:[%s1 + $0x10] sm:$0xff]
        %v153 = vld [vmem:[%s1 + $0x18] sm:$0xff]
        %v154 = vld [vmem:[%s1 + $0x20] sm:$0xff]
        %v155 = vld [vmem:[%s1 + $0x28] sm:$0xff]
        %v156 = vld [vmem:[%s1 + $0x30] sm:$0xff]
        %v157 = vld [vmem:[%s1 + $0x38] sm:$0xff]
        %v158 = vld [vmem:[%s1 + $0x40] sm:$0xff]
        %v159 = vld [vmem:[%s1 + $0x48] sm:$0xff]
        %v160 = vld [vmem:[%s1 + $0x50] sm:$0xff]
        %v161 = vld [vmem:[%s1 + $0x58] sm:$0xff]
        %v162 = vld [vmem:[%s1 + $0x60] sm:$0xff]
        %v163 = vld [vmem:[%s1 + $0x68] sm:$0xff]
        %v164 = vld [vmem:[%s1 + $0x70] sm:$0xff]
        %166 = vset.pattern.permute.xlu0 0
        %167 = vperm.xlu0 %166, %v154
        %v168 = vpop.permute.xlu0 %167
        %171 = vset.pattern.permute.xlu0 0
        %172 = vperm.xlu0 %171, %v155
        %v173 = vpop.permute.xlu0 %172
        %176 = vset.pattern.permute.xlu0 0
        %177 = vperm.xlu0 %176, %v156
        %v178 = vpop.permute.xlu0 %177
        %181 = vset.pattern.permute.xlu0 0
        %182 = vperm.xlu0 %181, %v157
        %v183 = vpop.permute.xlu0 %182
        %vm185 = vcmask 64512
        %v187 = vsel %vm185, %v150, 0
        %v190 = vsel %vm185, %v151, 0
        %v193 = vsel %vm185, %v152, 0
        %v196 = vsel %vm185, %v153, 0
        %198 = vmatprep.subr.mxu0 %v146
        %199 = vmatpush1.msra.mxu0 %v145
        %200 = vmatprep.subr.mxu0 0.0
        %201 = vmatpush1.msra.mxu0 0.0
        %202 = vmatprep.subr.mxu0 0.0
        %203 = vmatpush1.msra.mxu0 0.0
        %204 = vmatprep.subr.mxu0 0.0
        %205 = vmatpush1.msra.mxu0 0.0
        %206 = vmatprep.subr.mxu0 0.0
        %207 = vmatpush1.msra.mxu0 0.0
        %208 = vmatprep.subr.mxu0 0.0
        %209 = vmatpush1.msra.mxu0 0.0
        %210 = vmatprep.subr.mxu0 0.0
        %211 = vmatpush1.msra.mxu0 0.0
        %212 = vmatprep.subr.mxu0 0.0
        %213 = vmatpush1.msra.mxu0 0.0
        %214 = vmatprep.subr.mxu0 0.0
        %215 = vmatpush1.msra.mxu0 0.0
        %216 = vmatprep.subr.mxu0 0.0
        %217 = vmatpush1.msra.mxu0 0.0
        %218 = vmatprep.subr.mxu0 0.0
        %219 = vmatpush1.msra.mxu0 0.0
        %220 = vmatprep.subr.mxu0 0.0
        %221 = vmatpush1.msra.mxu0 0.0
        %222 = vmatprep.subr.mxu0 0.0
        %223 = vmatpush1.msra.mxu0 0.0
        %224 = vmatprep.subr.mxu0 0.0
        %225 = vmatpush1.msra.mxu0 0.0
        %226 = vmatprep.subr.mxu0 0.0
        %227 = vmatpush1.msra.mxu0 0.0
        %228 = vmatprep.subr.mxu0 0.0
        %229 = vmatpush1.msra.mxu0 0.0
        %230 = vmatprep.subr.mxu0 0.0
        %231 = vmatpush1.msra.mxu0 0.0
        %232 = vmatprep.subr.mxu0 0.0
        %233 = vmatpush1.msra.mxu0 0.0
        %234 = vmatprep.subr.mxu0 0.0
        %235 = vmatpush1.msra.mxu0 0.0
        %236 = vmatprep.subr.mxu0 0.0
        %237 = vmatpush1.msra.mxu0 0.0
        %238 = vmatprep.subr.mxu0 0.0
        %239 = vmatpush1.msra.mxu0 0.0
        %240 = vmatprep.subr.mxu0 0.0
        %241 = vmatpush1.msra.mxu0 0.0
        %242 = vmatprep.subr.mxu0 0.0
        %243 = vmatpush1.msra.mxu0 0.0
        %244 = vmatprep.subr.mxu0 0.0
        %245 = vmatpush1.msra.mxu0 0.0
        %246 = vmatprep.subr.mxu0 0.0
        %247 = vmatpush1.msra.mxu0 0.0
        %248 = vmatprep.subr.mxu0 0.0
        %249 = vmatpush1.msra.mxu0 0.0
        %250 = vmatprep.subr.mxu0 0.0
        %251 = vmatpush1.msra.mxu0 0.0
        %252 = vmatprep.subr.mxu0 0.0
        %253 = vmatpush1.msra.mxu0 0.0
        %254 = vmatprep.subr.mxu0 0.0
        %255 = vmatpush1.msra.mxu0 0.0
        %256 = vmatprep.subr.mxu0 0.0
        %257 = vmatpush1.msra.mxu0 0.0
        %258 = vmatprep.subr.mxu0 0.0
        %259 = vmatpush1.msra.mxu0 0.0
        %260 = vmatprep.subr.mxu0 0.0
        %261 = vmatpush1.msra.mxu0 0.0
        %262 = vmatprep.mubr.f32.mxu0 0.0
        %263 = vmatmul.mubr.f32.gmra.mrb[0].mxu0 %v187
        %v264 = vpop.f32.mrb[0].mxu0
        %v265 = vadd.f32 %v168, %v264
        %v266 = vpop.f32.mrb[0].mxu0
        %v267 = vadd.f32 %v168, %v266
        %268 = vmatprep.mubr.f32.mxu0 0.0
        %269 = vmatmul.mubr.f32.gmra.mrb[0].mxu0 %v190
        %v270 = vpop.f32.mrb[0].mxu0
        %v271 = vadd.f32 %v173, %v270
        %v272 = vpop.f32.mrb[0].mxu0
        %v273 = vadd.f32 %v173, %v272
        %274 = vmatprep.mubr.f32.mxu0 0.0
        %275 = vmatmul.mubr.f32.gmra.mrb[0].mxu0 %v193
        %v276 = vpop.f32.mrb[0].mxu0
        %v277 = vadd.f32 %v178, %v276
        %v278 = vpop.f32.mrb[0].mxu0
        %v279 = vadd.f32 %v178, %v278
        %280 = vmatprep.mubr.f32.mxu0 0.0
        %281 = vmatmul.mubr.f32.gmra.mrb[0].mxu0 %v196
        %v282 = vpop.f32.mrb[0].mxu0
        %v283 = vadd.f32 %v183, %v282
        %v284 = vpop.f32.mrb[0].mxu0
        %v285 = vadd.f32 %v183, %v284
        %286 = vdwg.mxu0
        %v287 = vmax.f32 %v265, 0.0
        %v288 = vmax.f32 %v267, 0.0
        %v289 = vmax.f32 %v271, 0.0
        %v290 = vmax.f32 %v273, 0.0
        %v291 = vmax.f32 %v277, 0.0
        %v292 = vmax.f32 %v279, 0.0
        %v293 = vmax.f32 %v283, 0.0
        %v294 = vmax.f32 %v285, 0.0
        %295 = vset.pattern.permute.xlu0 1
        %296 = vperm.xlu0 %295, %v154
        %v297 = vpop.permute.xlu0 %296
        %299 = vset.pattern.permute.xlu0 1
        %300 = vperm.xlu0 %299, %v155
        %v301 = vpop.permute.xlu0 %300
        %303 = vset.pattern.permute.xlu0 1
        %304 = vperm.xlu0 %303, %v156
        %v305 = vpop.permute.xlu0 %304
        %307 = vset.pattern.permute.xlu0 1
        %308 = vperm.xlu0 %307, %v157
        %v309 = vpop.permute.xlu0 %308
        %vm311 = vcmask 261120
        %v313 = vsel %vm311, %v158, 0
        %v316 = vsel %vm311, %v159, 0
        %v319 = vsel %vm311, %v160, 0
        %v322 = vsel %vm311, %v161, 0
        %324 = vmatprep.subr.mxu0 %v288
        %325 = vmatpush1.msra.mxu0 %v287
        %326 = vmatprep.subr.mxu0 %v290
        %327 = vmatpush1.msra.mxu0 %v289
        %328 = vmatprep.subr.mxu0 %v292
        %329 = vmatpush1.msra.mxu0 %v291
        %330 = vmatprep.subr.mxu0 %v294
        %331 = vmatpush1.msra.mxu0 %v293
        %332 = vmatprep.subr.mxu0 0.0
        %333 = vmatpush1.msra.mxu0 0.0
        %334 = vmatprep.subr.mxu0 0.0
        %335 = vmatpush1.msra.mxu0 0.0
        %336 = vmatprep.subr.mxu0 0.0
        %337 = vmatpush1.msra.mxu0 0.0
        %338 = vmatprep.subr.mxu0 0.0
        %339 = vmatpush1.msra.mxu0 0.0
        %340 = vmatprep.subr.mxu0 0.0
        %341 = vmatpush1.msra.mxu0 0.0
        %342 = vmatprep.subr.mxu0 0.0
        %343 = vmatpush1.msra.mxu0 0.0
        %344 = vmatprep.subr.mxu0 0.0
        %345 = vmatpush1.msra.mxu0 0.0
        %346 = vmatprep.subr.mxu0 0.0
        %347 = vmatpush1.msra.mxu0 0.0
        %348 = vmatprep.subr.mxu0 0.0
        %349 = vmatpush1.msra.mxu0 0.0
        %350 = vmatprep.subr.mxu0 0.0
        %351 = vmatpush1.msra.mxu0 0.0
        %352 = vmatprep.subr.mxu0 0.0
        %353 = vmatpush1.msra.mxu0 0.0
        %354 = vmatprep.subr.mxu0 0.0
        %355 = vmatpush1.msra.mxu0 0.0
        %356 = vmatprep.subr.mxu0 0.0
        %357 = vmatpush1.msra.mxu0 0.0
        %358 = vmatprep.subr.mxu0 0.0
        %359 = vmatpush1.msra.mxu0 0.0
        %360 = vmatprep.subr.mxu0 0.0
        %361 = vmatpush1.msra.mxu0 0.0
        %362 = vmatprep.subr.mxu0 0.0
        %363 = vmatpush1.msra.mxu0 0.0
        %364 = vmatprep.subr.mxu0 0.0
        %365 = vmatpush1.msra.mxu0 0.0
        %366 = vmatprep.subr.mxu0 0.0
        %367 = vmatpush1.msra.mxu0 0.0
        %368 = vmatprep.subr.mxu0 0.0
        %369 = vmatpush1.msra.mxu0 0.0
        %370 = vmatprep.subr.mxu0 0.0
        %371 = vmatpush1.msra.mxu0 0.0
        %372 = vmatprep.subr.mxu0 0.0
        %373 = vmatpush1.msra.mxu0 0.0
        %374 = vmatprep.subr.mxu0 0.0
        %375 = vmatpush1.msra.mxu0 0.0
        %376 = vmatprep.subr.mxu0 0.0
        %377 = vmatpush1.msra.mxu0 0.0
        %378 = vmatprep.subr.mxu0 0.0
        %379 = vmatpush1.msra.mxu0 0.0
        %380 = vmatprep.subr.mxu0 0.0
        %381 = vmatpush1.msra.mxu0 0.0
        %382 = vmatprep.subr.mxu0 0.0
        %383 = vmatpush1.msra.mxu0 0.0
        %384 = vmatprep.subr.mxu0 0.0
        %385 = vmatpush1.msra.mxu0 0.0
        %386 = vmatprep.subr.mxu0 0.0
        %387 = vmatpush1.msra.mxu0 0.0
        %388 = vmatprep.mubr.f32.mxu0 0.0
        %389 = vmatmul.mubr.f32.gmra.mrb[0].mxu0 %v313
        %v390 = vpop.f32.mrb[0].mxu0
        %v391 = vadd.f32 %v297, %v390
        %v392 = vpop.f32.mrb[0].mxu0
        %v393 = vadd.f32 %v297, %v392
        %394 = vmatprep.mubr.f32.mxu0 0.0
        %395 = vmatmul.mubr.f32.gmra.mrb[0].mxu0 %v316
        %v396 = vpop.f32.mrb[0].mxu0
        %v397 = vadd.f32 %v301, %v396
        %v398 = vpop.f32.mrb[0].mxu0
        %v399 = vadd.f32 %v301, %v398
        %400 = vmatprep.mubr.f32.mxu0 0.0
        %401 = vmatmul.mubr.f32.gmra.mrb[0].mxu0 %v319
        %v402 = vpop.f32.mrb[0].mxu0
        %v403 = vadd.f32 %v305, %v402
        %v404 = vpop.f32.mrb[0].mxu0
        %v405 = vadd.f32 %v305, %v404
        %406 = vmatprep.mubr.f32.mxu0 0.0
        %407 = vmatmul.mubr.f32.gmra.mrb[0].mxu0 %v322
        %v408 = vpop.f32.mrb[0].mxu0
        %v409 = vadd.f32 %v309, %v408
        %v410 = vpop.f32.mrb[0].mxu0
        %v411 = vadd.f32 %v309, %v410
        %412 = vdwg.mxu0
        %v413 = vmax.f32 %v391, 0.0
        %v414 = vmax.f32 %v393, 0.0
        %v415 = vmax.f32 %v397, 0.0
        %v416 = vmax.f32 %v399, 0.0
        %v417 = vmax.f32 %v403, 0.0
        %v418 = vmax.f32 %v405, 0.0
        %v419 = vmax.f32 %v409, 0.0
        %v420 = vmax.f32 %v411, 0.0
        %v422 = vsel %vm311, %v162, 0
        %v425 = vsel %vm311, %v163, 0
        %427 = vmatprep.subr.mxu0 %v414
        %428 = vmatpush1.msra.mxu0 %v413
        %429 = vmatprep.subr.mxu0 %v416
        %430 = vmatpush1.msra.mxu0 %v415
        %431 = vmatprep.subr.mxu0 %v418
        %432 = vmatpush1.msra.mxu0 %v417
        %433 = vmatprep.subr.mxu0 %v420
        %434 = vmatpush1.msra.mxu0 %v419
        %435 = vmatprep.subr.mxu0 0.0
        %436 = vmatpush1.msra.mxu0 0.0
        %437 = vmatprep.subr.mxu0 0.0
        %438 = vmatpush1.msra.mxu0 0.0
        %439 = vmatprep.subr.mxu0 0.0
        %440 = vmatpush1.msra.mxu0 0.0
        %441 = vmatprep.subr.mxu0 0.0
        %442 = vmatpush1.msra.mxu0 0.0
        %443 = vmatprep.subr.mxu0 0.0
        %444 = vmatpush1.msra.mxu0 0.0
        %445 = vmatprep.subr.mxu0 0.0
        %446 = vmatpush1.msra.mxu0 0.0
        %447 = vmatprep.subr.mxu0 0.0
        %448 = vmatpush1.msra.mxu0 0.0
        %449 = vmatprep.subr.mxu0 0.0
        %450 = vmatpush1.msra.mxu0 0.0
        %451 = vmatprep.subr.mxu0 0.0
        %452 = vmatpush1.msra.mxu0 0.0
        %453 = vmatprep.subr.mxu0 0.0
        %454 = vmatpush1.msra.mxu0 0.0
        %455 = vmatprep.subr.mxu0 0.0
        %456 = vmatpush1.msra.mxu0 0.0
        %457 = vmatprep.subr.mxu0 0.0
        %458 = vmatpush1.msra.mxu0 0.0
        %459 = vmatprep.subr.mxu0 0.0
        %460 = vmatpush1.msra.mxu0 0.0
        %461 = vmatprep.subr.mxu0 0.0
        %462 = vmatpush1.msra.mxu0 0.0
        %463 = vmatprep.subr.mxu0 0.0
        %464 = vmatpush1.msra.mxu0 0.0
        %465 = vmatprep.subr.mxu0 0.0
        %466 = vmatpush1.msra.mxu0 0.0
        %467 = vmatprep.subr.mxu0 0.0
        %468 = vmatpush1.msra.mxu0 0.0
        %469 = vmatprep.subr.mxu0 0.0
        %470 = vmatpush1.msra.mxu0 0.0
        %471 = vmatprep.subr.mxu0 0.0
        %472 = vmatpush1.msra.mxu0 0.0
        %473 = vmatprep.subr.mxu0 0.0
        %474 = vmatpush1.msra.mxu0 0.0
        %475 = vmatprep.subr.mxu0 0.0
        %476 = vmatpush1.msra.mxu0 0.0
        %477 = vmatprep.subr.mxu0 0.0
        %478 = vmatpush1.msra.mxu0 0.0
        %479 = vmatprep.subr.mxu0 0.0
        %480 = vmatpush1.msra.mxu0 0.0
        %481 = vmatprep.subr.mxu0 0.0
        %482 = vmatpush1.msra.mxu0 0.0
        %483 = vmatprep.subr.mxu0 0.0
        %484 = vmatpush1.msra.mxu0 0.0
        %485 = vmatprep.subr.mxu0 0.0
        %486 = vmatpush1.msra.mxu0 0.0
        %487 = vmatprep.subr.mxu0 0.0
        %488 = vmatpush1.msra.mxu0 0.0
        %489 = vmatprep.subr.mxu0 0.0
        %490 = vmatpush1.msra.mxu0 0.0
        %491 = vmatprep.mubr.f32.mxu0 0.0
        %492 = vmatmul.mubr.f32.gmra.mrb[0].mxu0 %v422
        %v493 = vpop.f32.mrb[0].mxu0
        %v494 = vadd.f32 0.0, %v493
        %v495 = vpop.f32.mrb[0].mxu0
        %v496 = vadd.f32 0.0, %v495
        %497 = vmatprep.mubr.f32.mxu0 0.0
        %498 = vmatmul.mubr.f32.gmra.mrb[0].mxu0 %v425
        %v499 = vpop.f32.mrb[0].mxu0
        %v500 = vadd.f32 0.0, %v499
        %v501 = vpop.f32.mrb[0].mxu0
        %v502 = vadd.f32 0.0, %v501
        %503 = vdwg.mxu0
        %505 = vset.pattern.permute.xlu0 0
        %506 = vperm.xlu0 %505, %v164
        %v507 = vpop.permute.xlu0 %506
        %v509 = vadd.f32 %v494, %v507
        %v510 = vadd.f32 %v496, %v507
        %v511 = vadd.f32 %v509, 2.0
        %v512 = vadd.f32 %v510, 2.0
        %513 = vset.pattern.permute.xlu0 1
        %514 = vperm.xlu0 %513, %v164
        %v515 = vpop.permute.xlu0 %514
        %v517 = vadd.f32 %v500, %v515
        %v518 = vadd.f32 %v502, %v515
        %v519 = vsub.f32 0.0, %v511
        %v520 = vsub.f32 0.0, %v512
        %v521 = vmul.f32 %v519, 1.442695
        %v522 = vpow.pop %v521
        %v523 = vmul.f32 %v520, 1.442695
        %v524 = vpow.pop %v523
        %v525 = vadd.f32 %v522, 1.0
        %v526 = vadd.f32 %v524, 1.0
        %v527 = vrcp.pop %v525
        %v528 = vmul.f32 1.0, %v527
        %v529 = vrcp.pop %v526
        %v530 = vmul.f32 1.0, %v529
        %v531 = vadd.f32 %v522, 1.0
        %v532 = vlog2.pop %v531
        %v533 = vmul.f32 %v532, 0.6931472
        %v534 = vmul.f32 -0.5, %v522
        %v535 = vadd.f32 %v534, 1.0
        %v536 = vmul.f32 %v535, %v522
        %v537 = vand.u32 2147483647, %v522
        %vm538 = vcmp.lt.f32.partialorder %v537, 0.0004427343
        %v539 = vsel %vm538, %v536, %v533
        %v540 = vadd.f32 %v524, 1.0
        %v541 = vlog2.pop %v540
        %v542 = vmul.f32 %v541, 0.6931472
        %v543 = vmul.f32 -0.5, %v524
        %v544 = vadd.f32 %v543, 1.0
        %v545 = vmul.f32 %v544, %v524
        %v546 = vand.u32 2147483647, %v524
        %vm547 = vcmp.lt.f32.partialorder %v546, 0.0004427343
        %v548 = vsel %vm547, %v545, %v542
        %v549 = vsub.f32 0.0, %v539
        %v550 = vsub.f32 0.0, %v548
        %v551 = vsel %vm149, 1, 0
        %vm552 = vcmp.eq.s32.totalorder %v551, 1
        %v553 = vsel %vm552, %v549, 0.0
        %v554 = vsel %vm552, %v550, 0.0
        %v555 = vrot.slane %v553, 4
        %v556 = vadd.f32 %v553, %v555
        %v557 = vrot.slane %v556, 2
        %v558 = vadd.f32 %v556, %v557
        %v559 = vrot.slane %v558, 1
        %v560 = vadd.f32 %v558, %v559
        %v561 = vrot.slane %v554, 4
        %v562 = vadd.f32 %v554, %v561
        %v563 = vrot.slane %v562, 2
        %v564 = vadd.f32 %v562, %v563
        %v565 = vrot.slane %v564, 1
        %v566 = vadd.f32 %v564, %v565
        %v567 = vmul.f32 %v145, %v528
        %v568 = vmul.f32 %v146, %v530
        %v569 = vadd.f32 %v567, %v517
        %v570 = vadd.f32 %v568, %v518
        %v571 = vsel %vm552, %v569, %v145
        %v572 = vsel %vm552, %v570, %v146
        %v573 = vsub.f32 0.0, %v560
        %v574 = vsub.f32 0.0, %v566
        %v575 = vld [vmem:[%s1 + $0x78] sm:$0xff]
        %v576 = vld [vmem:[%s1 + $0x80] sm:$0xff]
        %v577 = vld [vmem:[%s1 + $0x88] sm:$0xff]
        %v578 = vld [vmem:[%s1 + $0x90] sm:$0xff]
        %v579 = vld [vmem:[%s1 + $0x98] sm:$0xff]
        %v580 = vld [vmem:[%s1 + $0xa0] sm:$0xff]
        %v581 = vld [vmem:[%s1 + $0xa8] sm:$0xff]
        %v582 = vld [vmem:[%s1 + $0xb0] sm:$0xff]
        %v583 = vld [vmem:[%s1 + $0xb8] sm:$0xff]
        %v584 = vld [vmem:[%s1 + $0xc0] sm:$0xff]
        %v585 = vld [vmem:[%s1 + $0xc8] sm:$0xff]
        %v586 = vld [vmem:[%s1 + $0xd0] sm:$0xff]
        %v587 = vld [vmem:[%s1 + $0xd8] sm:$0xff]
        %v588 = vld [vmem:[%s1 + $0xe0] sm:$0xff]
        %v589 = vld [vmem:[%s1 + $0xe8] sm:$0xff]
        %591 = vset.pattern.permute.xlu0 0
        %592 = vperm.xlu0 %591, %v579
        %v593 = vpop.permute.xlu0 %592
        %596 = vset.pattern.permute.xlu0 0
        %597 = vperm.xlu0 %596, %v580
        %v598 = vpop.permute.xlu0 %597
        %601 = vset.pattern.permute.xlu0 0
        %602 = vperm.xlu0 %601, %v581
        %v603 = vpop.permute.xlu0 %602
        %606 = vset.pattern.permute.xlu0 0
        %607 = vperm.xlu0 %606, %v582
        %v608 = vpop.permute.xlu0 %607
        %v611 = vsel %vm185, %v575, 0
        %v614 = vsel %vm185, %v576, 0
        %v617 = vsel %vm185, %v577, 0
        %v620 = vsel %vm185, %v578, 0
        %622 = vmatprep.subr.mxu0 %v572
        %623 = vmatpush1.msra.mxu0 %v571
        %624 = vmatprep.subr.mxu0 0.0
        %625 = vmatpush1.msra.mxu0 0.0
        %626 = vmatprep.subr.mxu0 0.0
        %627 = vmatpush1.msra.mxu0 0.0
        %628 = vmatprep.subr.mxu0 0.0
        %629 = vmatpush1.msra.mxu0 0.0
        %630 = vmatprep.subr.mxu0 0.0
        %631 = vmatpush1.msra.mxu0 0.0
        %632 = vmatprep.subr.mxu0 0.0
        %633 = vmatpush1.msra.mxu0 0.0
        %634 = vmatprep.subr.mxu0 0.0
        %635 = vmatpush1.msra.mxu0 0.0
        %636 = vmatprep.subr.mxu0 0.0
        %637 = vmatpush1.msra.mxu0 0.0
        %638 = vmatprep.subr.mxu0 0.0
        %639 = vmatpush1.msra.mxu0 0.0
        %640 = vmatprep.subr.mxu0 0.0
        %641 = vmatpush1.msra.mxu0 0.0
        %642 = vmatprep.subr.mxu0 0.0
        %643 = vmatpush1.msra.mxu0 0.0
        %644 = vmatprep.subr.mxu0 0.0
        %645 = vmatpush1.msra.mxu0 0.0
        %646 = vmatprep.subr.mxu0 0.0
        %647 = vmatpush1.msra.mxu0 0.0
        %648 = vmatprep.subr.mxu0 0.0
        %649 = vmatpush1.msra.mxu0 0.0
        %650 = vmatprep.subr.mxu0 0.0
        %651 = vmatpush1.msra.mxu0 0.0
        %652 = vmatprep.subr.mxu0 0.0
        %653 = vmatpush1.msra.mxu0 0.0
        %654 = vmatprep.subr.mxu0 0.0
        %655 = vmatpush1.msra.mxu0 0.0
        %656 = vmatprep.subr.mxu0 0.0
        %657 = vmatpush1.msra.mxu0 0.0
        %658 = vmatprep.subr.mxu0 0.0
        %659 = vmatpush1.msra.mxu0 0.0
        %660 = vmatprep.subr.mxu0 0.0
        %661 = vmatpush1.msra.mxu0 0.0
        %662 = vmatprep.subr.mxu0 0.0
        %663 = vmatpush1.msra.mxu0 0.0
        %664 = vmatprep.subr.mxu0 0.0
        %665 = vmatpush1.msra.mxu0 0.0
        %666 = vmatprep.subr.mxu0 0.0
        %667 = vmatpush1.msra.mxu0 0.0
        %668 = vmatprep.subr.mxu0 0.0
        %669 = vmatpush1.msra.mxu0 0.0
        %670 = vmatprep.subr.mxu0 0.0
        %671 = vmatpush1.msra.mxu0 0.0
        %672 = vmatprep.subr.mxu0 0.0
        %673 = vmatpush1.msra.mxu0 0.0
        %674 = vmatprep.subr.mxu0 0.0
        %675 = vmatpush1.msra.mxu0 0.0
        %676 = vmatprep.subr.mxu0 0.0
        %677 = vmatpush1.msra.mxu0 0.0
        %678 = vmatprep.subr.mxu0 0.0
        %679 = vmatpush1.msra.mxu0 0.0
        %680 = vmatprep.subr.mxu0 0.0
        %681 = vmatpush1.msra.mxu0 0.0
        %682 = vmatprep.subr.mxu0 0.0
        %683 = vmatpush1.msra.mxu0 0.0
        %684 = vmatprep.subr.mxu0 0.0
        %685 = vmatpush1.msra.mxu0 0.0
        %686 = vmatprep.mubr.f32.mxu0 0.0
        %687 = vmatmul.mubr.f32.gmra.mrb[0].mxu0 %v611
        %v688 = vpop.f32.mrb[0].mxu0
        %v689 = vadd.f32 %v593, %v688
        %v690 = vpop.f32.mrb[0].mxu0
        %v691 = vadd.f32 %v593, %v690
        %692 = vmatprep.mubr.f32.mxu0 0.0
        %693 = vmatmul.mubr.f32.gmra.mrb[0].mxu0 %v614
        %v694 = vpop.f32.mrb[0].mxu0
        %v695 = vadd.f32 %v598, %v694
        %v696 = vpop.f32.mrb[0].mxu0
        %v697 = vadd.f32 %v598, %v696
        %698 = vmatprep.mubr.f32.mxu0 0.0
        %699 = vmatmul.mubr.f32.gmra.mrb[0].mxu0 %v617
        %v700 = vpop.f32.mrb[0].mxu0
        %v701 = vadd.f32 %v603, %v700
        %v702 = vpop.f32.mrb[0].mxu0
        %v703 = vadd.f32 %v603, %v702
        %704 = vmatprep.mubr.f32.mxu0 0.0
        %705 = vmatmul.mubr.f32.gmra.mrb[0].mxu0 %v620
        %v706 = vpop.f32.mrb[0].mxu0
        %v707 = vadd.f32 %v608, %v706
        %v708 = vpop.f32.mrb[0].mxu0
        %v709 = vadd.f32 %v608, %v708
        %710 = vdwg.mxu0
        %v711 = vmax.f32 %v689, 0.0
        %v712 = vmax.f32 %v691, 0.0
        %v713 = vmax.f32 %v695, 0.0
        %v714 = vmax.f32 %v697, 0.0
        %v715 = vmax.f32 %v701, 0.0
        %v716 = vmax.f32 %v703, 0.0
        %v717 = vmax.f32 %v707, 0.0
        %v718 = vmax.f32 %v709, 0.0
        %719 = vset.pattern.permute.xlu0 1
        %720 = vperm.xlu0 %719, %v579
        %v721 = vpop.permute.xlu0 %720
        %723 = vset.pattern.permute.xlu0 1
        %724 = vperm.xlu0 %723, %v580
        %v725 = vpop.permute.xlu0 %724
        %727 = vset.pattern.permute.xlu0 1
        %728 = vperm.xlu0 %727, %v581
        %v729 = vpop.permute.xlu0 %728
        %731 = vset.pattern.permute.xlu0 1
        %732 = vperm.xlu0 %731, %v582
        %v733 = vpop.permute.xlu0 %732
        %v736 = vsel %vm311, %v583, 0
        %v739 = vsel %vm311, %v584, 0
        %v742 = vsel %vm311, %v585, 0
        %v745 = vsel %vm311, %v586, 0
        %747 = vmatprep.subr.mxu0 %v712
        %748 = vmatpush1.msra.mxu0 %v711
        %749 = vmatprep.subr.mxu0 %v714
        %750 = vmatpush1.msra.mxu0 %v713
        %751 = vmatprep.subr.mxu0 %v716
        %752 = vmatpush1.msra.mxu0 %v715
        %753 = vmatprep.subr.mxu0 %v718
        %754 = vmatpush1.msra.mxu0 %v717
        %755 = vmatprep.subr.mxu0 0.0
        %756 = vmatpush1.msra.mxu0 0.0
        %757 = vmatprep.subr.mxu0 0.0
        %758 = vmatpush1.msra.mxu0 0.0
        %759 = vmatprep.subr.mxu0 0.0
        %760 = vmatpush1.msra.mxu0 0.0
        %761 = vmatprep.subr.mxu0 0.0
        %762 = vmatpush1.msra.mxu0 0.0
        %763 = vmatprep.subr.mxu0 0.0
        %764 = vmatpush1.msra.mxu0 0.0
        %765 = vmatprep.subr.mxu0 0.0
        %766 = vmatpush1.msra.mxu0 0.0
        %767 = vmatprep.subr.mxu0 0.0
        %768 = vmatpush1.msra.mxu0 0.0
        %769 = vmatprep.subr.mxu0 0.0
        %770 = vmatpush1.msra.mxu0 0.0
        %771 = vmatprep.subr.mxu0 0.0
        %772 = vmatpush1.msra.mxu0 0.0
        %773 = vmatprep.subr.mxu0 0.0
        %774 = vmatpush1.msra.mxu0 0.0
        %775 = vmatprep.subr.mxu0 0.0
        %776 = vmatpush1.msra.mxu0 0.0
        %777 = vmatprep.subr.mxu0 0.0
        %778 = vmatpush1.msra.mxu0 0.0
        %779 = vmatprep.subr.mxu0 0.0
        %780 = vmatpush1.msra.mxu0 0.0
        %781 = vmatprep.subr.mxu0 0.0
        %782 = vmatpush1.msra.mxu0 0.0
        %783 = vmatprep.subr.mxu0 0.0
        %784 = vmatpush1.msra.mxu0 0.0
        %785 = vmatprep.subr.mxu0 0.0
        %786 = vmatpush1.msra.mxu0 0.0
        %787 = vmatprep.subr.mxu0 0.0
        %788 = vmatpush1.msra.mxu0 0.0
        %789 = vmatprep.subr.mxu0 0.0
        %790 = vmatpush1.msra.mxu0 0.0
        %791 = vmatprep.subr.mxu0 0.0
        %792 = vmatpush1.msra.mxu0 0.0
        %793 = vmatprep.subr.mxu0 0.0
        %794 = vmatpush1.msra.mxu0 0.0
        %795 = vmatprep.subr.mxu0 0.0
        %796 = vmatpush1.msra.mxu0 0.0
        %797 = vmatprep.subr.mxu0 0.0
        %798 = vmatpush1.msra.mxu0 0.0
        %799 = vmatprep.subr.mxu0 0.0
        %800 = vmatpush1.msra.mxu0 0.0
        %801 = vmatprep.subr.mxu0 0.0
        %802 = vmatpush1.msra.mxu0 0.0
        %803 = vmatprep.subr.mxu0 0.0
        %804 = vmatpush1.msra.mxu0 0.0
        %805 = vmatprep.subr.mxu0 0.0
        %806 = vmatpush1.msra.mxu0 0.0
        %807 = vmatprep.subr.mxu0 0.0
        %808 = vmatpush1.msra.mxu0 0.0
        %809 = vmatprep.subr.mxu0 0.0
        %810 = vmatpush1.msra.mxu0 0.0
        %811 = vmatprep.mubr.f32.mxu0 0.0
        %812 = vmatmul.mubr.f32.gmra.mrb[0].mxu0 %v736
        %v813 = vpop.f32.mrb[0].mxu0
        %v814 = vadd.f32 %v721, %v813
        %v815 = vpop.f32.mrb[0].mxu0
        %v816 = vadd.f32 %v721, %v815
        %817 = vmatprep.mubr.f32.mxu0 0.0
        %818 = vmatmul.mubr.f32.gmra.mrb[0].mxu0 %v739
        %v819 = vpop.f32.mrb[0].mxu0
        %v820 = vadd.f32 %v725, %v819
        %v821 = vpop.f32.mrb[0].mxu0
        %v822 = vadd.f32 %v725, %v821
        %823 = vmatprep.mubr.f32.mxu0 0.0
        %824 = vmatmul.mubr.f32.gmra.mrb[0].mxu0 %v742
        %v825 = vpop.f32.mrb[0].mxu0
        %v826 = vadd.f32 %v729, %v825
        %v827 = vpop.f32.mrb[0].mxu0
        %v828 = vadd.f32 %v729, %v827
        %829 = vmatprep.mubr.f32.mxu0 0.0
        %830 = vmatmul.mubr.f32.gmra.mrb[0].mxu0 %v745
        %v831 = vpop.f32.mrb[0].mxu0
        %v832 = vadd.f32 %v733, %v831
        %v833 = vpop.f32.mrb[0].mxu0
        %v834 = vadd.f32 %v733, %v833
        %835 = vdwg.mxu0
        %v836 = vmax.f32 %v814, 0.0
        %v837 = vmax.f32 %v816, 0.0
        %v838 = vmax.f32 %v820, 0.0
        %v839 = vmax.f32 %v822, 0.0
        %v840 = vmax.f32 %v826, 0.0
        %v841 = vmax.f32 %v828, 0.0
        %v842 = vmax.f32 %v832, 0.0
        %v843 = vmax.f32 %v834, 0.0
        %v845 = vsel %vm311, %v587, 0
        %v848 = vsel %vm311, %v588, 0
        %850 = vmatprep.subr.mxu0 %v837
        %851 = vmatpush1.msra.mxu0 %v836
        %852 = vmatprep.subr.mxu0 %v839
        %853 = vmatpush1.msra.mxu0 %v838
        %854 = vmatprep.subr.mxu0 %v841
        %855 = vmatpush1.msra.mxu0 %v840
        %856 = vmatprep.subr.mxu0 %v843
        %857 = vmatpush1.msra.mxu0 %v842
        %858 = vmatprep.subr.mxu0 0.0
        %859 = vmatpush1.msra.mxu0 0.0
        %860 = vmatprep.subr.mxu0 0.0
        %861 = vmatpush1.msra.mxu0 0.0
        %862 = vmatprep.subr.mxu0 0.0
        %863 = vmatpush1.msra.mxu0 0.0
        %864 = vmatprep.subr.mxu0 0.0
        %865 = vmatpush1.msra.mxu0 0.0
        %866 = vmatprep.subr.mxu0 0.0
        %867 = vmatpush1.msra.mxu0 0.0
        %868 = vmatprep.subr.mxu0 0.0
        %869 = vmatpush1.msra.mxu0 0.0
        %870 = vmatprep.subr.mxu0 0.0
        %871 = vmatpush1.msra.mxu0 0.0
        %872 = vmatprep.subr.mxu0 0.0
        %873 = vmatpush1.msra.mxu0 0.0
        %874 = vmatprep.subr.mxu0 0.0
        %875 = vmatpush1.msra.mxu0 0.0
        %876 = vmatprep.subr.mxu0 0.0
        %877 = vmatpush1.msra.mxu0 0.0
        %878 = vmatprep.subr.mxu0 0.0
        %879 = vmatpush1.msra.mxu0 0.0
        %880 = vmatprep.subr.mxu0 0.0
        %881 = vmatpush1.msra.mxu0 0.0
        %882 = vmatprep.subr.mxu0 0.0
        %883 = vmatpush1.msra.mxu0 0.0
        %884 = vmatprep.subr.mxu0 0.0
        %885 = vmatpush1.msra.mxu0 0.0
        %886 = vmatprep.subr.mxu0 0.0
        %887 = vmatpush1.msra.mxu0 0.0
        %888 = vmatprep.subr.mxu0 0.0
        %889 = vmatpush1.msra.mxu0 0.0
        %890 = vmatprep.subr.mxu0 0.0
        %891 = vmatpush1.msra.mxu0 0.0
        %892 = vmatprep.subr.mxu0 0.0
        %893 = vmatpush1.msra.mxu0 0.0
        %894 = vmatprep.subr.mxu0 0.0
        %895 = vmatpush1.msra.mxu0 0.0
        %896 = vmatprep.subr.mxu0 0.0
        %897 = vmatpush1.msra.mxu0 0.0
        %898 = vmatprep.subr.mxu0 0.0
        %899 = vmatpush1.msra.mxu0 0.0
        %900 = vmatprep.subr.mxu0 0.0
        %901 = vmatpush1.msra.mxu0 0.0
        %902 = vmatprep.subr.mxu0 0.0
        %903 = vmatpush1.msra.mxu0 0.0
        %904 = vmatprep.subr.mxu0 0.0
        %905 = vmatpush1.msra.mxu0 0.0
        %906 = vmatprep.subr.mxu0 0.0
        %907 = vmatpush1.msra.mxu0 0.0
        %908 = vmatprep.subr.mxu0 0.0
        %909 = vmatpush1.msra.mxu0 0.0
        %910 = vmatprep.subr.mxu0 0.0
        %911 = vmatpush1.msra.mxu0 0.0
        %912 = vmatprep.subr.mxu0 0.0
        %913 = vmatpush1.msra.mxu0 0.0
        %914 = vmatprep.mubr.f32.mxu0 0.0
        %915 = vmatmul.mubr.f32.gmra.mrb[0].mxu0 %v845
        %v916 = vpop.f32.mrb[0].mxu0
        %v917 = vadd.f32 0.0, %v916
        %v918 = vpop.f32.mrb[0].mxu0
        %v919 = vadd.f32 0.0, %v918
        %920 = vmatprep.mubr.f32.mxu0 0.0
        %921 = vmatmul.mubr.f32.gmra.mrb[0].mxu0 %v848
        %v922 = vpop.f32.mrb[0].mxu0
        %v923 = vadd.f32 0.0, %v922
        %v924 = vpop.f32.mrb[0].mxu0
        %v925 = vadd.f32 0.0, %v924
        %926 = vdwg.mxu0
        %928 = vset.pattern.permute.xlu0 0
        %929 = vperm.xlu0 %928, %v589
        %v930 = vpop.permute.xlu0 %929
        %v932 = vadd.f32 %v917, %v930
        %v933 = vadd.f32 %v919, %v930
        %v934 = vadd.f32 %v932, 2.0
        %v935 = vadd.f32 %v933, 2.0
        %936 = vset.pattern.permute.xlu0 1
        %937 = vperm.xlu0 %936, %v589
        %v938 = vpop.permute.xlu0 %937
        %v940 = vadd.f32 %v923, %v938
        %v941 = vadd.f32 %v925, %v938
        %vm942 = vmxor %vm149, 1
        %v943 = vsub.f32 0.0, %v934
        %v944 = vsub.f32 0.0, %v935
        %v945 = vmul.f32 %v943, 1.442695
        %v946 = vpow.pop %v945
        %v947 = vmul.f32 %v944, 1.442695
        %v948 = vpow.pop %v947
        %v949 = vadd.f32 %v946, 1.0
        %v950 = vadd.f32 %v948, 1.0
        %v951 = vrcp.pop %v949
        %v952 = vmul.f32 1.0, %v951
        %v953 = vrcp.pop %v950
        %v954 = vmul.f32 1.0, %v953
        %v955 = vadd.f32 %v946, 1.0
        %v956 = vlog2.pop %v955
        %v957 = vmul.f32 %v956, 0.6931472
        %v958 = vmul.f32 -0.5, %v946
        %v959 = vadd.f32 %v958, 1.0
        %v960 = vmul.f32 %v959, %v946
        %v961 = vand.u32 2147483647, %v946
        %vm962 = vcmp.lt.f32.partialorder %v961, 0.0004427343
        %v963 = vsel %vm962, %v960, %v957
        %v964 = vadd.f32 %v948, 1.0
        %v965 = vlog2.pop %v964
        %v966 = vmul.f32 %v965, 0.6931472
        %v967 = vmul.f32 -0.5, %v948
        %v968 = vadd.f32 %v967, 1.0
        %v969 = vmul.f32 %v968, %v948
        %v970 = vand.u32 2147483647, %v948
        %vm971 = vcmp.lt.f32.partialorder %v970, 0.0004427343
        %v972 = vsel %vm971, %v969, %v966
        %v973 = vsub.f32 0.0, %v963
        %v974 = vsub.f32 0.0, %v972
        %v975 = vsel %vm942, 1, 0
        %vm976 = vcmp.eq.s32.totalorder %v975, 1
        %v977 = vsel %vm976, %v973, 0.0
        %v978 = vsel %vm976, %v974, 0.0
        %v979 = vrot.slane %v977, 4
        %v980 = vadd.f32 %v977, %v979
        %v981 = vrot.slane %v980, 2
        %v982 = vadd.f32 %v980, %v981
        %v983 = vrot.slane %v982, 1
        %v984 = vadd.f32 %v982, %v983
        %v985 = vrot.slane %v978, 4
        %v986 = vadd.f32 %v978, %v985
        %v987 = vrot.slane %v986, 2
        %v988 = vadd.f32 %v986, %v987
        %v989 = vrot.slane %v988, 1
        %v990 = vadd.f32 %v988, %v989
        %v991 = vmul.f32 %v571, %v952
        %v992 = vmul.f32 %v572, %v954
        %v993 = vadd.f32 %v991, %v940
        %v994 = vadd.f32 %v992, %v941
        %v995 = vsel %vm976, %v993, %v571
        %v996 = vsel %vm976, %v994, %v572
        %v997 = vsub.f32 %v573, %v984
        %v998 = vsub.f32 %v574, %v990
        %v999 = vld [vmem:[%s1 + $0xf0] sm:$0xff]
        %v1000 = vld [vmem:[%s1 + $0xf8] sm:$0xff]
        %v1001 = vld [vmem:[%s1 + $0x100] sm:$0xff]
        %v1002 = vld [vmem:[%s1 + $0x108] sm:$0xff]
        %v1003 = vld [vmem:[%s1 + $0x110] sm:$0xff]
        %v1004 = vld [vmem:[%s1 + $0x118] sm:$0xff]
        %v1005 = vld [vmem:[%s1 + $0x120] sm:$0xff]
        %v1006 = vld [vmem:[%s1 + $0x128] sm:$0xff]
        %v1007 = vld [vmem:[%s1 + $0x130] sm:$0xff]
        %v1008 = vld [vmem:[%s1 + $0x138] sm:$0xff]
        %v1009 = vld [vmem:[%s1 + $0x140] sm:$0xff]
        %v1010 = vld [vmem:[%s1 + $0x148] sm:$0xff]
        %v1011 = vld [vmem:[%s1 + $0x150] sm:$0xff]
        %v1012 = vld [vmem:[%s1 + $0x158] sm:$0xff]
        %v1013 = vld [vmem:[%s1 + $0x160] sm:$0xff]
        %1015 = vset.pattern.permute.xlu0 0
        %1016 = vperm.xlu0 %1015, %v1003
        %v1017 = vpop.permute.xlu0 %1016
        %1020 = vset.pattern.permute.xlu0 0
        %1021 = vperm.xlu0 %1020, %v1004
        %v1022 = vpop.permute.xlu0 %1021
        %1025 = vset.pattern.permute.xlu0 0
        %1026 = vperm.xlu0 %1025, %v1005
        %v1027 = vpop.permute.xlu0 %1026
        %1030 = vset.pattern.permute.xlu0 0
        %1031 = vperm.xlu0 %1030, %v1006
        %v1032 = vpop.permute.xlu0 %1031
        %v1035 = vsel %vm185, %v999, 0
        %v1038 = vsel %vm185, %v1000, 0
        %v1041 = vsel %vm185, %v1001, 0
        %v1044 = vsel %vm185, %v1002, 0
        %1046 = vmatprep.subr.mxu0 %v996
        %1047 = vmatpush1.msra.mxu0 %v995
        %1048 = vmatprep.subr.mxu0 0.0
        %1049 = vmatpush1.msra.mxu0 0.0
        %1050 = vmatprep.subr.mxu0 0.0
        %1051 = vmatpush1.msra.mxu0 0.0
        %1052 = vmatprep.subr.mxu0 0.0
        %1053 = vmatpush1.msra.mxu0 0.0
        %1054 = vmatprep.subr.mxu0 0.0
        %1055 = vmatpush1.msra.mxu0 0.0
        %1056 = vmatprep.subr.mxu0 0.0
        %1057 = vmatpush1.msra.mxu0 0.0
        %1058 = vmatprep.subr.mxu0 0.0
        %1059 = vmatpush1.msra.mxu0 0.0
        %1060 = vmatprep.subr.mxu0 0.0
        %1061 = vmatpush1.msra.mxu0 0.0
        %1062 = vmatprep.subr.mxu0 0.0
        %1063 = vmatpush1.msra.mxu0 0.0
        %1064 = vmatprep.subr.mxu0 0.0
        %1065 = vmatpush1.msra.mxu0 0.0
        %1066 = vmatprep.subr.mxu0 0.0
        %1067 = vmatpush1.msra.mxu0 0.0
        %1068 = vmatprep.subr.mxu0 0.0
        %1069 = vmatpush1.msra.mxu0 0.0
        %1070 = vmatprep.subr.mxu0 0.0
        %1071 = vmatpush1.msra.mxu0 0.0
        %1072 = vmatprep.subr.mxu0 0.0
        %1073 = vmatpush1.msra.mxu0 0.0
        %1074 = vmatprep.subr.mxu0 0.0
        %1075 = vmatpush1.msra.mxu0 0.0
        %1076 = vmatprep.subr.mxu0 0.0
        %1077 = vmatpush1.msra.mxu0 0.0
        %1078 = vmatprep.subr.mxu0 0.0
        %1079 = vmatpush1.msra.mxu0 0.0
        %1080 = vmatprep.subr.mxu0 0.0
        %1081 = vmatpush1.msra.mxu0 0.0
        %1082 = vmatprep.subr.mxu0 0.0
        %1083 = vmatpush1.msra.mxu0 0.0
        %1084 = vmatprep.subr.mxu0 0.0
        %1085 = vmatpush1.msra.mxu0 0.0
        %1086 = vmatprep.subr.mxu0 0.0
        %1087 = vmatpush1.msra.mxu0 0.0
        %1088 = vmatprep.subr.mxu0 0.0
        %1089 = vmatpush1.msra.mxu0 0.0
        %1090 = vmatprep.subr.mxu0 0.0
        %1091 = vmatpush1.msra.mxu0 0.0
        %1092 = vmatprep.subr.mxu0 0.0
        %1093 = vmatpush1.msra.mxu0 0.0
        %1094 = vmatprep.subr.mxu0 0.0
        %1095 = vmatpush1.msra.mxu0 0.0
        %1096 = vmatprep.subr.mxu0 0.0
        %1097 = vmatpush1.msra.mxu0 0.0
        %1098 = vmatprep.subr.mxu0 0.0
        %1099 = vmatpush1.msra.mxu0 0.0
        %1100 = vmatprep.subr.mxu0 0.0
        %1101 = vmatpush1.msra.mxu0 0.0
        %1102 = vmatprep.subr.mxu0 0.0
        %1103 = vmatpush1.msra.mxu0 0.0
        %1104 = vmatprep.subr.mxu0 0.0
        %1105 = vmatpush1.msra.mxu0 0.0
        %1106 = vmatprep.subr.mxu0 0.0
        %1107 = vmatpush1.msra.mxu0 0.0
        %1108 = vmatprep.subr.mxu0 0.0
        %1109 = vmatpush1.msra.mxu0 0.0
        %1110 = vmatprep.mubr.f32.mxu0 0.0
        %1111 = vmatmul.mubr.f32.gmra.mrb[0].mxu0 %v1035
        %v1112 = vpop.f32.mrb[0].mxu0
        %v1113 = vadd.f32 %v1017, %v1112
        %v1114 = vpop.f32.mrb[0].mxu0
        %v1115 = vadd.f32 %v1017, %v1114
        %1116 = vmatprep.mubr.f32.mxu0 0.0
        %1117 = vmatmul.mubr.f32.gmra.mrb[0].mxu0 %v1038
        %v1118 = vpop.f32.mrb[0].mxu0
        %v1119 = vadd.f32 %v1022, %v1118
        %v1120 = vpop.f32.mrb[0].mxu0
        %v1121 = vadd.f32 %v1022, %v1120
        %1122 = vmatprep.mubr.f32.mxu0 0.0
        %1123 = vmatmul.mubr.f32.gmra.mrb[0].mxu0 %v1041
        %v1124 = vpop.f32.mrb[0].mxu0
        %v1125 = vadd.f32 %v1027, %v1124
        %v1126 = vpop.f32.mrb[0].mxu0
        %v1127 = vadd.f32 %v1027, %v1126
        %1128 = vmatprep.mubr.f32.mxu0 0.0
        %1129 = vmatmul.mubr.f32.gmra.mrb[0].mxu0 %v1044
        %v1130 = vpop.f32.mrb[0].mxu0
        %v1131 = vadd.f32 %v1032, %v1130
        %v1132 = vpop.f32.mrb[0].mxu0
        %v1133 = vadd.f32 %v1032, %v1132
        %1134 = vdwg.mxu0
        %v1135 = vmax.f32 %v1113, 0.0
        %v1136 = vmax.f32 %v1115, 0.0
        %v1137 = vmax.f32 %v1119, 0.0
        %v1138 = vmax.f32 %v1121, 0.0
        %v1139 = vmax.f32 %v1125, 0.0
        %v1140 = vmax.f32 %v1127, 0.0
        %v1141 = vmax.f32 %v1131, 0.0
        %v1142 = vmax.f32 %v1133, 0.0
        %1143 = vset.pattern.permute.xlu0 1
        %1144 = vperm.xlu0 %1143, %v1003
        %v1145 = vpop.permute.xlu0 %1144
        %1147 = vset.pattern.permute.xlu0 1
        %1148 = vperm.xlu0 %1147, %v1004
        %v1149 = vpop.permute.xlu0 %1148
        %1151 = vset.pattern.permute.xlu0 1
        %1152 = vperm.xlu0 %1151, %v1005
        %v1153 = vpop.permute.xlu0 %1152
        %1155 = vset.pattern.permute.xlu0 1
        %1156 = vperm.xlu0 %1155, %v1006
        %v1157 = vpop.permute.xlu0 %1156
        %v1160 = vsel %vm311, %v1007, 0
        %v1163 = vsel %vm311, %v1008, 0
        %v1166 = vsel %vm311, %v1009, 0
        %v1169 = vsel %vm311, %v1010, 0
        %1171 = vmatprep.subr.mxu0 %v1136
        %1172 = vmatpush1.msra.mxu0 %v1135
        %1173 = vmatprep.subr.mxu0 %v1138
        %1174 = vmatpush1.msra.mxu0 %v1137
        %1175 = vmatprep.subr.mxu0 %v1140
        %1176 = vmatpush1.msra.mxu0 %v1139
        %1177 = vmatprep.subr.mxu0 %v1142
        %1178 = vmatpush1.msra.mxu0 %v1141
        %1179 = vmatprep.subr.mxu0 0.0
        %1180 = vmatpush1.msra.mxu0 0.0
        %1181 = vmatprep.subr.mxu0 0.0
        %1182 = vmatpush1.msra.mxu0 0.0
        %1183 = vmatprep.subr.mxu0 0.0
        %1184 = vmatpush1.msra.mxu0 0.0
        %1185 = vmatprep.subr.mxu0 0.0
        %1186 = vmatpush1.msra.mxu0 0.0
        %1187 = vmatprep.subr.mxu0 0.0
        %1188 = vmatpush1.msra.mxu0 0.0
        %1189 = vmatprep.subr.mxu0 0.0
        %1190 = vmatpush1.msra.mxu0 0.0
        %1191 = vmatprep.subr.mxu0 0.0
        %1192 = vmatpush1.msra.mxu0 0.0
        %1193 = vmatprep.subr.mxu0 0.0
        %1194 = vmatpush1.msra.mxu0 0.0
        %1195 = vmatprep.subr.mxu0 0.0
        %1196 = vmatpush1.msra.mxu0 0.0
        %1197 = vmatprep.subr.mxu0 0.0
        %1198 = vmatpush1.msra.mxu0 0.0
        %1199 = vmatprep.subr.mxu0 0.0
        %1200 = vmatpush1.msra.mxu0 0.0
        %1201 = vmatprep.subr.mxu0 0.0
        %1202 = vmatpush1.msra.mxu0 0.0
        %1203 = vmatprep.subr.mxu0 0.0
        %1204 = vmatpush1.msra.mxu0 0.0
        %1205 = vmatprep.subr.mxu0 0.0
        %1206 = vmatpush1.msra.mxu0 0.0
        %1207 = vmatprep.subr.mxu0 0.0
        %1208 = vmatpush1.msra.mxu0 0.0
        %1209 = vmatprep.subr.mxu0 0.0
        %1210 = vmatpush1.msra.mxu0 0.0
        %1211 = vmatprep.subr.mxu0 0.0
        %1212 = vmatpush1.msra.mxu0 0.0
        %1213 = vmatprep.subr.mxu0 0.0
        %1214 = vmatpush1.msra.mxu0 0.0
        %1215 = vmatprep.subr.mxu0 0.0
        %1216 = vmatpush1.msra.mxu0 0.0
        %1217 = vmatprep.subr.mxu0 0.0
        %1218 = vmatpush1.msra.mxu0 0.0
        %1219 = vmatprep.subr.mxu0 0.0
        %1220 = vmatpush1.msra.mxu0 0.0
        %1221 = vmatprep.subr.mxu0 0.0
        %1222 = vmatpush1.msra.mxu0 0.0
        %1223 = vmatprep.subr.mxu0 0.0
        %1224 = vmatpush1.msra.mxu0 0.0
        %1225 = vmatprep.subr.mxu0 0.0
        %1226 = vmatpush1.msra.mxu0 0.0
        %1227 = vmatprep.subr.mxu0 0.0
        %1228 = vmatpush1.msra.mxu0 0.0
        %1229 = vmatprep.subr.mxu0 0.0
        %1230 = vmatpush1.msra.mxu0 0.0
        %1231 = vmatprep.subr.mxu0 0.0
        %1232 = vmatpush1.msra.mxu0 0.0
        %1233 = vmatprep.subr.mxu0 0.0
        %1234 = vmatpush1.msra.mxu0 0.0
        %1235 = vmatprep.mubr.f32.mxu0 0.0
        %1236 = vmatmul.mubr.f32.gmra.mrb[0].mxu0 %v1160
        %v1237 = vpop.f32.mrb[0].mxu0
        %v1238 = vadd.f32 %v1145, %v1237
        %v1239 = vpop.f32.mrb[0].mxu0
        %v1240 = vadd.f32 %v1145, %v1239
        %1241 = vmatprep.mubr.f32.mxu0 0.0
        %1242 = vmatmul.mubr.f32.gmra.mrb[0].mxu0 %v1163
        %v1243 = vpop.f32.mrb[0].mxu0
        %v1244 = vadd.f32 %v1149, %v1243
        %v1245 = vpop.f32.mrb[0].mxu0
        %v1246 = vadd.f32 %v1149, %v1245
        %1247 = vmatprep.mubr.f32.mxu0 0.0
        %1248 = vmatmul.mubr.f32.gmra.mrb[0].mxu0 %v1166
        %v1249 = vpop.f32.mrb[0].mxu0
        %v1250 = vadd.f32 %v1153, %v1249
        %v1251 = vpop.f32.mrb[0].mxu0
        %v1252 = vadd.f32 %v1153, %v1251
        %1253 = vmatprep.mubr.f32.mxu0 0.0
        %1254 = vmatmul.mubr.f32.gmra.mrb[0].mxu0 %v1169
        %v1255 = vpop.f32.mrb[0].mxu0
        %v1256 = vadd.f32 %v1157, %v1255
        %v1257 = vpop.f32.mrb[0].mxu0
        %v1258 = vadd.f32 %v1157, %v1257
        %1259 = vdwg.mxu0
        %v1260 = vmax.f32 %v1238, 0.0
        %v1261 = vmax.f32 %v1240, 0.0
        %v1262 = vmax.f32 %v1244, 0.0
        %v1263 = vmax.f32 %v1246, 0.0
        %v1264 = vmax.f32 %v1250, 0.0
        %v1265 = vmax.f32 %v1252, 0.0
        %v1266 = vmax.f32 %v1256, 0.0
        %v1267 = vmax.f32 %v1258, 0.0
        %v1269 = vsel %vm311, %v1011, 0
        %v1272 = vsel %vm311, %v1012, 0
        %1274 = vmatprep.subr.mxu0 %v1261
        %1275 = vmatpush1.msra.mxu0 %v1260
        %1276 = vmatprep.subr.mxu0 %v1263
        %1277 = vmatpush1.msra.mxu0 %v1262
        %1278 = vmatprep.subr.mxu0 %v1265
        %1279 = vmatpush1.msra.mxu0 %v1264
        %1280 = vmatprep.subr.mxu0 %v1267
        %1281 = vmatpush1.msra.mxu0 %v1266
        %1282 = vmatprep.subr.mxu0 0.0
        %1283 = vmatpush1.msra.mxu0 0.0
        %1284 = vmatprep.subr.mxu0 0.0
        %1285 = vmatpush1.msra.mxu0 0.0
        %1286 = vmatprep.subr.mxu0 0.0
        %1287 = vmatpush1.msra.mxu0 0.0
        %1288 = vmatprep.subr.mxu0 0.0
        %1289 = vmatpush1.msra.mxu0 0.0
        %1290 = vmatprep.subr.mxu0 0.0
        %1291 = vmatpush1.msra.mxu0 0.0
        %1292 = vmatprep.subr.mxu0 0.0
        %1293 = vmatpush1.msra.mxu0 0.0
        %1294 = vmatprep.subr.mxu0 0.0
        %1295 = vmatpush1.msra.mxu0 0.0
        %1296 = vmatprep.subr.mxu0 0.0
        %1297 = vmatpush1.msra.mxu0 0.0
        %1298 = vmatprep.subr.mxu0 0.0
        %1299 = vmatpush1.msra.mxu0 0.0
        %1300 = vmatprep.subr.mxu0 0.0
        %1301 = vmatpush1.msra.mxu0 0.0
        %1302 = vmatprep.subr.mxu0 0.0
        %1303 = vmatpush1.msra.mxu0 0.0
        %1304 = vmatprep.subr.mxu0 0.0
        %1305 = vmatpush1.msra.mxu0 0.0
        %1306 = vmatprep.subr.mxu0 0.0
        %1307 = vmatpush1.msra.mxu0 0.0
        %1308 = vmatprep.subr.mxu0 0.0
        %1309 = vmatpush1.msra.mxu0 0.0
        %1310 = vmatprep.subr.mxu0 0.0
        %1311 = vmatpush1.msra.mxu0 0.0
        %1312 = vmatprep.subr.mxu0 0.0
        %1313 = vmatpush1.msra.mxu0 0.0
        %1314 = vmatprep.subr.mxu0 0.0
        %1315 = vmatpush1.msra.mxu0 0.0
        %1316 = vmatprep.subr.mxu0 0.0
        %1317 = vmatpush1.msra.mxu0 0.0
        %1318 = vmatprep.subr.mxu0 0.0
        %1319 = vmatpush1.msra.mxu0 0.0
        %1320 = vmatprep.subr.mxu0 0.0
        %1321 = vmatpush1.msra.mxu0 0.0
        %1322 = vmatprep.subr.mxu0 0.0
        %1323 = vmatpush1.msra.mxu0 0.0
        %1324 = vmatprep.subr.mxu0 0.0
        %1325 = vmatpush1.msra.mxu0 0.0
        %1326 = vmatprep.subr.mxu0 0.0
        %1327 = vmatpush1.msra.mxu0 0.0
        %1328 = vmatprep.subr.mxu0 0.0
        %1329 = vmatpush1.msra.mxu0 0.0
        %1330 = vmatprep.subr.mxu0 0.0
        %1331 = vmatpush1.msra.mxu0 0.0
        %1332 = vmatprep.subr.mxu0 0.0
        %1333 = vmatpush1.msra.mxu0 0.0
        %1334 = vmatprep.subr.mxu0 0.0
        %1335 = vmatpush1.msra.mxu0 0.0
        %1336 = vmatprep.subr.mxu0 0.0
        %1337 = vmatpush1.msra.mxu0 0.0
        %1338 = vmatprep.mubr.f32.mxu0 0.0
        %1339 = vmatmul.mubr.f32.gmra.mrb[0].mxu0 %v1269
        %v1340 = vpop.f32.mrb[0].mxu0
        %v1341 = vadd.f32 0.0, %v1340
        %v1342 = vpop.f32.mrb[0].mxu0
        %v1343 = vadd.f32 0.0, %v1342
        %1344 = vmatprep.mubr.f32.mxu0 0.0
        %1345 = vmatmul.mubr.f32.gmra.mrb[0].mxu0 %v1272
        %v1346 = vpop.f32.mrb[0].mxu0
        %v1347 = vadd.f32 0.0, %v1346
        %v1348 = vpop.f32.mrb[0].mxu0
        %v1349 = vadd.f32 0.0, %v1348
        %1350 = vdwg.mxu0
        %1352 = vset.pattern.permute.xlu0 0
        %1353 = vperm.xlu0 %1352, %v1013
        %v1354 = vpop.permute.xlu0 %1353
        %v1356 = vadd.f32 %v1341, %v1354
        %v1357 = vadd.f32 %v1343, %v1354
        %v1358 = vadd.f32 %v1356, 2.0
        %v1359 = vadd.f32 %v1357, 2.0
        %1360 = vset.pattern.permute.xlu0 1
        %1361 = vperm.xlu0 %1360, %v1013
        %v1362 = vpop.permute.xlu0 %1361
        %v1364 = vadd.f32 %v1347, %v1362
        %v1365 = vadd.f32 %v1349, %v1362
        %v1366 = vsub.f32 0.0, %v1358
        %v1367 = vsub.f32 0.0, %v1359
        %v1368 = vmul.f32 %v1366, 1.442695
        %v1369 = vpow.pop %v1368
        %v1370 = vmul.f32 %v1367, 1.442695
        %v1371 = vpow.pop %v1370
        %v1372 = vadd.f32 %v1369, 1.0
        %v1373 = vadd.f32 %v1371, 1.0
        %v1374 = vrcp.pop %v1372
        %v1375 = vmul.f32 1.0, %v1374
        %v1376 = vrcp.pop %v1373
        %v1377 = vmul.f32 1.0, %v1376
        %v1378 = vadd.f32 %v1369, 1.0
        %v1379 = vlog2.pop %v1378
        %v1380 = vmul.f32 %v1379, 0.6931472
        %v1381 = vmul.f32 -0.5, %v1369
        %v1382 = vadd.f32 %v1381, 1.0
        %v1383 = vmul.f32 %v1382, %v1369
        %v1384 = vand.u32 2147483647, %v1369
        %vm1385 = vcmp.lt.f32.partialorder %v1384, 0.0004427343
        %v1386 = vsel %vm1385, %v1383, %v1380
        %v1387 = vadd.f32 %v1371, 1.0
        %v1388 = vlog2.pop %v1387
        %v1389 = vmul.f32 %v1388, 0.6931472
        %v1390 = vmul.f32 -0.5, %v1371
        %v1391 = vadd.f32 %v1390, 1.0
        %v1392 = vmul.f32 %v1391, %v1371
        %v1393 = vand.u32 2147483647, %v1371
        %vm1394 = vcmp.lt.f32.partialorder %v1393, 0.0004427343
        %v1395 = vsel %vm1394, %v1392, %v1389
        %v1396 = vsub.f32 0.0, %v1386
        %v1397 = vsub.f32 0.0, %v1395
        %v1398 = vsel %vm552, %v1396, 0.0
        %v1399 = vsel %vm552, %v1397, 0.0
        %v1400 = vrot.slane %v1398, 4
        %v1401 = vadd.f32 %v1398, %v1400
        %v1402 = vrot.slane %v1401, 2
        %v1403 = vadd.f32 %v1401, %v1402
        %v1404 = vrot.slane %v1403, 1
        %v1405 = vadd.f32 %v1403, %v1404
        %v1406 = vrot.slane %v1399, 4
        %v1407 = vadd.f32 %v1399, %v1406
        %v1408 = vrot.slane %v1407, 2
        %v1409 = vadd.f32 %v1407, %v1408
        %v1410 = vrot.slane %v1409, 1
        %v1411 = vadd.f32 %v1409, %v1410
        %v1412 = vmul.f32 %v995, %v1375
        %v1413 = vmul.f32 %v996, %v1377
        %v1414 = vadd.f32 %v1412, %v1364
        %v1415 = vadd.f32 %v1413, %v1365
        %v1416 = vsel %vm552, %v1414, %v995
        %v1417 = vsel %vm552, %v1415, %v996
        %v1418 = vsub.f32 %v997, %v1405
        %v1419 = vsub.f32 %v998, %v1411
        %v1420 = vmul.f32 %v1416, 0.5
        %v1421 = vmul.f32 %v1417, 0.5
        %v1422 = vmul.f32 %v1420, %v1416
        %v1423 = vmul.f32 %v1421, %v1417
        %v1424 = vsub.f32 -0.9189385, %v1422
        %v1425 = vsub.f32 -0.9189385, %v1423
        %v1426 = vrot.slane %v1424, 4
        %v1427 = vadd.f32 %v1424, %v1426
        %v1428 = vrot.slane %v1427, 2
        %v1429 = vadd.f32 %v1427, %v1428
        %v1430 = vrot.slane %v1429, 1
        %v1431 = vadd.f32 %v1429, %v1430
        %v1432 = vrot.slane %v1425, 4
        %v1433 = vadd.f32 %v1425, %v1432
        %v1434 = vrot.slane %v1433, 2
        %v1435 = vadd.f32 %v1433, %v1434
        %v1436 = vrot.slane %v1435, 1
        %v1437 = vadd.f32 %v1435, %v1436
        %v1438 = vsub.f32 %v1431, %v1418
        %v1439 = vsub.f32 %v1437, %v1419
        %1440 = vst [vmem:[%s137] sm:$0xff] %v1416
        %1441 = vst [vmem:[%s137 + $0x8] sm:$0xff] %v1417
        %v1442 = vsub.f32 0.0, %v1418
        %v1443 = vsub.f32 0.0, %v1419
        %v1446 = vcombine.low %v1442, %v1443
        %v1448 = vunpack.c.l.s4 1966171168
        %v1449 = vunpack.c.0.s8 %v1448
        %v1450 = vlaneseq
        %v1451 = vshrl.u32 %v1450, 7
        %v1452 = vsub.s32 %v1449, %v1451
        %v1453 = vrot.slane %v1446, %v1452
        %v1455 = vunpack.c.l.s4 1966171168
        %v1456 = vunpack.c.0.s8 %v1455
        %v1457 = vlaneseq
        %v1458 = vshrl.u32 %v1457, 7
        %v1459 = vsub.s32 %v1456, %v1458
        %v1460 = vrot.slane %v1453, %v1459
        %v1462 = vlaneseq
        %vm1463 = vcmp.ge.s32.totalorder %v1462, 0
        %vm1464 = vcmp.lt.s32.totalorder %v1462, 256
        %vm1465 = vmand %vm1463, %vm1464
        %s1466 = scalar_lea.vmem %s137, 16 [#allocation2]
        %1467 = vst.msk [vmem:[%s1466] ss:$8 sm:$0x3] %vm1465, %v1460
        %1468 = vst.msk [vmem:[%s1466] ss:$8 sm:$0x0] %vm1465, %v1460
        %v1471 = vcombine.low %v1438, %v1439
        %v1473 = vunpack.c.l.s4 1966171168
        %v1474 = vunpack.c.0.s8 %v1473
        %v1475 = vlaneseq
        %v1476 = vshrl.u32 %v1475, 7
        %v1477 = vsub.s32 %v1474, %v1476
        %v1478 = vrot.slane %v1471, %v1477
        %v1480 = vunpack.c.l.s4 1966171168
        %v1481 = vunpack.c.0.s8 %v1480
        %v1482 = vlaneseq
        %v1483 = vshrl.u32 %v1482, 7
        %v1484 = vsub.s32 %v1481, %v1483
        %v1485 = vrot.slane %v1478, %v1484
        %s1487 = scalar_lea.vmem %s137, 17 [#allocation2]
        %1488 = vst.msk [vmem:[%s1487] ss:$8 sm:$0x3] %vm1465, %v1485
        %1489 = vst.msk [vmem:[%s1487] ss:$8 sm:$0x0] %vm1465, %v1485
        %s1490 = sand.u32 %s71, 1
        %s1491 = scalar_lea.sflag [#allocation3], %s1490
        %s1492 = sand.u32 %s71, 1
        %s1493 = smul.addr %s1492, 32
        %s1494 = scalar_lea.vmem [#allocation2], %s1493
        // Predicated region
        $region29: #{tpu_custom_call.1} parent=27 // pred_check
          %p1495 = pneg %p81
        $region30: #{tpu_custom_call.1} parent=27 // pred_check_branch
          %1497 = sbr.rel (%p1495) target = $region32
        $region31: #{tpu_custom_call.1} parent=27 // pred_region
          %s1498 = smul.u32 2, %s16
          %s1500 = ssub.s32 512, 512
          %1501 = vsyncadd %s1491, %s1500
          %s1502 = smul.addr %s1498, 128
          %s1503 = scalar_lea.hbm %s2, %s1502
          %s1504 = sshll.u32 %s1494, 4
          %s1505 = int_to_ptr.vmem [resolvable:$true] %s1504
          %1510 = dma.vmem_to_hbm [thread:$0]  %s1505, 512, %s1503, %s1491, 256, 512, 16
        $region32: #{tpu_custom_call.1} parent=27 // pred_fallthru
          _
      $region28: #{tpu_custom_call.1} parent=5 // pred_fallthru
        _
      %p1511 = scmp.le.s32.totalorder 2, %s11
      // Predicated region
      $region33: #{tpu_custom_call.1} parent=5 // pred_check
        %p1512 = pneg %p1511
      $region34: #{tpu_custom_call.1} parent=5 // pred_check_branch
        %1514 = sbr.rel (%p1512) target = $region36
      $region35: #{tpu_custom_call.1} parent=5 // pred_region
        %s1515 = ssub.s32 %s11, 2
        // Predicated region
        $region37: #{tpu_custom_call.1} parent=35 // pred_check
          %p1516 = pneg %p87
        $region38: #{tpu_custom_call.1} parent=35 // pred_check_branch
          %1518 = sbr.rel (%p1516) target = $region40
        $region39: #{tpu_custom_call.1} parent=35 // pred_region
          %s1519 = sand.u32 %s72, 1
          %s1520 = scalar_lea.sflag [#allocation3], %s1519
          %s1521 = sand.u32 %s72, 1
          %s1522 = smul.addr %s1521, 32
          %s1523 = scalar_lea.vmem [#allocation2], %s1522
          %1524 = dma.done %s1520, 512
        $region40: #{tpu_custom_call.1} parent=35 // pred_fallthru
          _
      $region36: #{tpu_custom_call.1} parent=5 // pred_fallthru
        _
    $region6: #{tpu_custom_call.1} parent=1 // loop_footer
      %s15 = sadd.s32 1, %s11
    $region7: #{tpu_custom_call.1} parent=1 // loop_footer_branch
      %10 = sbr.rel target = $region3
    $region8: #{tpu_custom_call.1} parent=1 // loop_exit
      _
    %1525 = vsyncpa [#allocation3], 1
    %s1526 = scalar_lea.sflag [#allocation3], 1
    %1527 = vsyncpa %s1526, 1

</llo_original>
